<compile_context>
chip_gen: v7x
topology: tpu7x:2x2x1
jax: 0.10.0
libtpu: 0.0.40
codegen_flags: <defaults>
</compile_context>

<pallas_src>
import functools

import jax
import jax.numpy as jnp
from jax.experimental import pallas as pl
from jax.experimental.pallas import tpu as pltpu

NEG_SLOPE = 1.0          # torch.nn.LeakyReLU(True): True -> negative_slope = 1.0
BN_EPS = 1e-5            # torch.nn.BatchNorm3d default eps
VMEM_LIMIT = 32 * 1024 * 1024   # safe on v5e/v6e (128 MiB phys) and v7x (64 MiB phys)


def _round_up(x, m):
    return ((x + m - 1) // m) * m


def _im2col_3d(x, k, s):
    """x: (N, C, D, H, W) -> patches (N*Do*Ho*Wo, C*k^3), col order (ci, kd, kh, kw)."""
    N, C, D, H, W = x.shape
    Do = (D - k) // s + 1
    Ho = (H - k) // s + 1
    Wo = (W - k) // s + 1
    cols = []
    for kd in range(k):
        for kh in range(k):
            for kw in range(k):
                cols.append(x[:, :, kd:kd + s * Do:s, kh:kh + s * Ho:s, kw:kw + s * Wo:s])
    p = jnp.stack(cols, axis=2)                     # (N, C, k^3, Do, Ho, Wo)
    p = p.reshape(N, C * k * k * k, Do, Ho, Wo)     # flatten (C, k^3) -> ci*k^3 + t
    p = jnp.transpose(p, (0, 2, 3, 4, 1))           # (N, Do, Ho, Wo, C*k^3)
    return p.reshape(N * Do * Ho * Wo, C * k * k * k), (Do, Ho, Wo)


def _conv_stats_kernel(M, TM, p_ref, w_ref, b_ref, y_ref, stats_ref):
    """Conv-as-matmul (+bias); emits per-tile per-channel sum / sum-of-squares for BN.

    Stats are written per-tile (no resident accumulator), so the grid axis is
    safe to mark "parallel" (megacore sharding on v7x).
    """
    i = pl.program_id(0)
    # bf16 x bf16 -> f32 accumulate on the MXU.
    y = jnp.dot(p_ref[...], w_ref[...], preferred_element_type=jnp.float32) + b_ref[...]
    y_ref[...] = y

    # Mask rows that are padding (beyond the true M) out of the BN statistics.
    row = i * TM + jax.lax.broadcasted_iota(jnp.int32, (TM, 1), 0)
    ym = jnp.where(row < M, y, 0.0)
    s = jnp.sum(ym, axis=0, keepdims=True)          # (1, Cp)
    ss = jnp.sum(ym * ym, axis=0, keepdims=True)    # (1, Cp)
    stats_ref[...] = jnp.concatenate([s, ss], axis=0).reshape(stats_ref.shape)


def _bn_lrelu_kernel(y_ref, scale_ref, shift_ref, o_ref):
    """Fused affine batch-norm + LeakyReLU (elementwise, lane-dense tiles)."""
    z = y_ref[...] * scale_ref[...] + shift_ref[...]
    o_ref[...] = jnp.where(z >= 0, z, NEG_SLOPE * z)


def conv3d_custom_forward(x, weight, bias, gamma, beta, *,
                          kernel=3, stride=1, tm=1024, use_bf16=True):
    """x: (N, Cin, D, H, W); weight: (Cout, Cin, k, k, k); bias/gamma/beta: (Cout,)."""
    N, Cin, D, H, W = x.shape
    Cout = weight.shape[0]
    k, s = kernel, stride

    compute_dtype = jnp.bfloat16 if use_bf16 else jnp.float32

    # im2col (XLA side) in the MXU compute dtype (halves patch-matrix HBM traffic).
    p, (Do, Ho, Wo) = _im2col_3d(x.astype(compute_dtype), k, s)
    M, K = p.shape

    # Lane-dense padding: K and Cout up to multiples of 128; M up to a multiple of tm.
    Kp = _round_up(K, 128)
    Cp = _round_up(Cout, 128)
    tm = max(256, min(tm, _round_up(M, 256)))       # don't over-pad tiny problems
    M_pad = pl.cdiv(M, tm) * tm
    n_tiles = M_pad // tm

    p = jnp.pad(p, ((0, M_pad - M), (0, Kp - K)))
    w2 = jnp.pad(weight.reshape(Cout, K).T.astype(compute_dtype),
                 ((0, Kp - K), (0, Cp - Cout)))                         # (Kp, Cp)
    b2 = jnp.pad(bias.reshape(1, Cout).astype(jnp.float32),
                 ((0, 0), (0, Cp - Cout)))                              # (1, Cp)

    cparams = pltpu.CompilerParams(dimension_semantics=("parallel",),
                                   vmem_limit_bytes=VMEM_LIMIT)

    # Kernel 1: tiled im2col matmul (+bias), per-tile BN partial statistics.
    y, stats = pl.pallas_call(
        functools.partial(_conv_stats_kernel, M, tm),
        out_shape=(jax.ShapeDtypeStruct((M_pad, Cp), jnp.float32),
                   jax.ShapeDtypeStruct((n_tiles, 2, Cp), jnp.float32)),
        grid_spec=pltpu.PrefetchScalarGridSpec(
            num_scalar_prefetch=0,
            grid=(n_tiles,),
            in_specs=[pl.BlockSpec((tm, Kp), lambda i: (i, 0)),
                      pl.BlockSpec((Kp, Cp), lambda i: (0, 0)),
                      pl.BlockSpec((1, Cp), lambda i: (0, 0))],
            out_specs=(pl.BlockSpec((tm, Cp), lambda i: (i, 0)),
                       pl.BlockSpec((1, 2, Cp), lambda i: (i, 0, 0)))),
        compiler_params=cparams,
    )(p, w2, b2)

    # BatchNorm3d (training mode): biased batch variance, affine params.
    tot = jnp.sum(stats, axis=0)                    # (2, Cp)
    mean = tot[0, :Cout] / M
    var = tot[1, :Cout] / M - mean * mean
    inv_std = jax.lax.rsqrt(var + BN_EPS)
    scale = gamma.astype(jnp.float32) * inv_std
    shift = beta.astype(jnp.float32) - mean * scale
    scale = jnp.pad(scale.reshape(1, Cout), ((0, 0), (0, Cp - Cout)))
    shift = jnp.pad(shift.reshape(1, Cout), ((0, 0), (0, Cp - Cout)))

    # Kernel 2: fused normalize + LeakyReLU, lane-dense tiles, y aliased into out.
    out = pl.pallas_call(
        _bn_lrelu_kernel,
        out_shape=jax.ShapeDtypeStruct((M_pad, Cp), jnp.float32),
        grid_spec=pltpu.PrefetchScalarGridSpec(
            num_scalar_prefetch=0,
            grid=(n_tiles,),
            in_specs=[pl.BlockSpec((tm, Cp), lambda i: (i, 0)),
                      pl.BlockSpec((1, Cp), lambda i: (0, 0)),
                      pl.BlockSpec((1, Cp), lambda i: (0, 0))],
            out_specs=pl.BlockSpec((tm, Cp), lambda i: (i, 0))),
        input_output_aliases={0: 0},
        compiler_params=cparams,
    )(y, scale, shift)

    # Strip padding, back to NCDHW.  (Output tensor is small vs the patch matrix.)
    out = out[:M, :Cout].reshape(N, Do, Ho, Wo, Cout)
    return jnp.transpose(out, (0, 4, 1, 2, 3))


if __name__ == "__main__":
    key = jax.random.PRNGKey(0)
    kx, kw, kb = jax.random.split(key, 3)

    # Module defaults: kernel=3, stride=1, in_feat=3, out_feat=3, batch_norm=True.
    N, Cin, Cout, k, S = 2, 3, 3, 3, 10
    x = jax.random.normal(kx, (N, Cin, S, S, S), dtype=jnp.float32)

    # Deterministic parameter init (mimics PyTorch Conv3d default uniform bound).
    fan_in = Cin * k ** 3
    bound = 1.0 / (fan_in ** 0.5)
    weight = jax.random.uniform(kw, (Cout, Cin, k, k, k), jnp.float32, -bound, bound)
    bias = jax.random.uniform(kb, (Cout,), jnp.float32, -bound, bound)
    gamma = jnp.ones((Cout,), jnp.float32)   # BatchNorm3d default weight
    beta = jnp.zeros((Cout,), jnp.float32)   # BatchNorm3d default bias

    fwd = jax.jit(functools.partial(conv3d_custom_forward, kernel=k, stride=1))
    out = fwd(x, weight, bias, gamma, beta)
    out = jax.block_until_ready(out)
    assert out.shape == (N, Cout, S - k + 1, S - k + 1, S - k + 1)
    print("KERNEL_OK")
</pallas_src>

<mosaic_0001>
module attributes {stable_mosaic.version = 11 : i64} {
  func.func @_conv_stats_kernel(%arg0: i32, %arg1: memref<1024x128xbf16, #tpu.memory_space<vmem>>, %arg2: memref<128x128xbf16, #tpu.memory_space<vmem>>, %arg3: memref<1x128xf32, #tpu.memory_space<vmem>>, %arg4: memref<1024x128xf32, #tpu.memory_space<vmem>>, %arg5: memref<1x2x128xf32, #tpu.memory_space<vmem>>) attributes {dimension_semantics = [#tpu.dimension_semantics<parallel>], iteration_bounds = array<i64: 1>, scalar_prefetch = 0 : i64, scratch_operands = 0 : i64, tpu.core_type = #tpu.core_type<tc>, window_params = [{transform_indices = @transform_0, window_bounds = array<i64: 1024, 128>}, {pipeline_mode = #tpu.pipeline_mode<synchronous>, transform_indices = @transform_1, window_bounds = array<i64: 128, 128>}, {pipeline_mode = #tpu.pipeline_mode<synchronous>, transform_indices = @transform_2, window_bounds = array<i64: 1, 128>}, {transform_indices = @transform_3, window_bounds = array<i64: 1024, 128>}, {transform_indices = @transform_4, window_bounds = array<i64: 1, 2, 128>}]} {
    %c0 = arith.constant 0 : index
    %c0_0 = arith.constant 0 : index
    %0 = vector.load %arg1[%c0, %c0_0] : memref<1024x128xbf16, #tpu.memory_space<vmem>>, vector<1024x128xbf16>
    %c0_1 = arith.constant 0 : index
    %c0_2 = arith.constant 0 : index
    %1 = vector.load %arg2[%c0_1, %c0_2] : memref<128x128xbf16, #tpu.memory_space<vmem>>, vector<128x128xbf16>
    %cst = arith.constant dense<0.000000e+00> : vector<1024x128xf32>
    %2 = tpu.matmul %0, %1, %cst {dimension_numbers = #tpu.dot_dimension_numbers<[1], [0], [0], [1], [0, 0, 1, 1], [], []>} : vector<1024x128xbf16>, vector<128x128xbf16>, vector<1024x128xf32> -> vector<1024x128xf32>
    %c0_3 = arith.constant 0 : index
    %c0_4 = arith.constant 0 : index
    %3 = vector.load %arg3[%c0_3, %c0_4] : memref<1x128xf32, #tpu.memory_space<vmem>>, vector<1x128xf32>
    %4 = vector.broadcast %3 : vector<1x128xf32> to vector<1024x128xf32>
    %5 = arith.addf %2, %4 : vector<1024x128xf32>
    %c0_5 = arith.constant 0 : index
    %c0_6 = arith.constant 0 : index
    %6 = vector.load %arg4[%c0_5, %c0_6] : memref<1024x128xf32, #tpu.memory_space<vmem>>, vector<1024x128xf32>
    tpu.vector_store %arg4[%c0_5, %c0_6], %5 {strides = array<i32>} : memref<1024x128xf32, #tpu.memory_space<vmem>>, vector<1024x128xf32>,
    %c1024_i32 = arith.constant 1024 : i32
    %7 = arith.muli %arg0, %c1024_i32 : i32
    %8 = tpu.iota {dimensions = array<i32: 0>} : vector<1024x1xi32>
    %9 = vector.broadcast %7 : i32 to vector<1024x1xi32>
    %10 = arith.addi %9, %8 : vector<1024x1xi32>
    %c1024_i32_7 = arith.constant 1024 : i32
    %11 = vector.broadcast %c1024_i32_7 : i32 to vector<1024x1xi32>
    %12 = arith.cmpi slt, %10, %11 : vector<1024x1xi32>
    %cst_8 = arith.constant 0.000000e+00 : f32
    %13 = vector.shape_cast %12 : vector<1024x1xi1> to vector<1024x1xi1>
    %14 = vector.broadcast %13 : vector<1024x1xi1> to vector<1024x128xi1>
    %15 = vector.broadcast %cst_8 : f32 to vector<1024x128xf32>
    %16 = arith.select %14, %5, %15 : vector<1024x128xi1>, vector<1024x128xf32>
    %cst_9 = arith.constant dense<0.000000e+00> : vector<128xf32>
    %17 = vector.multi_reduction <add>, %16, %cst_9 [0] : vector<1024x128xf32> to vector<128xf32>
    %18 = vector.shape_cast %17 : vector<128xf32> to vector<1x128xf32>
    %19 = arith.mulf %16, %16 : vector<1024x128xf32>
    %cst_10 = arith.constant dense<0.000000e+00> : vector<128xf32>
    %20 = vector.multi_reduction <add>, %19, %cst_10 [0] : vector<1024x128xf32> to vector<128xf32>
    %21 = vector.shape_cast %20 : vector<128xf32> to vector<1x128xf32>
    %22 = tpu.concatenate %18, %21 in 0 : vector<1x128xf32>, vector<1x128xf32> -> vector<2x128xf32>
    %23 = vector.shape_cast %22 : vector<2x128xf32> to vector<1x2x128xf32>
    %c0_11 = arith.constant 0 : index
    %c0_12 = arith.constant 0 : index
    %c0_13 = arith.constant 0 : index
    %24 = vector.load %arg5[%c0_11, %c0_12, %c0_13] : memref<1x2x128xf32, #tpu.memory_space<vmem>>, vector<1x2x128xf32>
    tpu.vector_store %arg5[%c0_11, %c0_12, %c0_13], %23 {strides = array<i32>} : memref<1x2x128xf32, #tpu.memory_space<vmem>>, vector<1x2x128xf32>,
    return
  }
  func.func @transform_0(%arg0: i32) -> (i32, i32) {
    %c0_i32 = arith.constant 0 : i32
    %c0_i32_0 = arith.constant 0 : i32
    return %arg0, %c0_i32 : i32, i32
  }
  func.func @transform_1(%arg0: i32) -> (i32, i32) {
    %c0_i32 = arith.constant 0 : i32
    %c0_i32_0 = arith.constant 0 : i32
    %c0_i32_1 = arith.constant 0 : i32
    return %c0_i32, %c0_i32_0 : i32, i32
  }
  func.func @transform_2(%arg0: i32) -> (i32, i32) {
    %c0_i32 = arith.constant 0 : i32
    %c0_i32_0 = arith.constant 0 : i32
    %c0_i32_1 = arith.constant 0 : i32
    return %c0_i32, %c0_i32_0 : i32, i32
  }
  func.func @transform_3(%arg0: i32) -> (i32, i32) {
    %c0_i32 = arith.constant 0 : i32
    %c0_i32_0 = arith.constant 0 : i32
    return %arg0, %c0_i32 : i32, i32
  }
  func.func @transform_4(%arg0: i32) -> (i32, i32, i32) {
    %c0_i32 = arith.constant 0 : i32
    %c0_i32_0 = arith.constant 0 : i32
    %c0_i32_1 = arith.constant 0 : i32
    return %arg0, %c0_i32, %c0_i32_0 : i32, i32, i32
  }
}

module attributes {stable_mosaic.version = 11 : i64} {
  func.func @_bn_lrelu_kernel(%arg0: i32, %arg1: memref<1024x128xf32, #tpu.memory_space<vmem>>, %arg2: memref<1x128xf32, #tpu.memory_space<vmem>>, %arg3: memref<1x128xf32, #tpu.memory_space<vmem>>, %arg4: memref<1024x128xf32, #tpu.memory_space<vmem>>) attributes {dimension_semantics = [#tpu.dimension_semantics<parallel>], iteration_bounds = array<i64: 1>, scalar_prefetch = 0 : i64, scratch_operands = 0 : i64, tpu.core_type = #tpu.core_type<tc>, window_params = [{transform_indices = @transform_0, window_bounds = array<i64: 1024, 128>}, {pipeline_mode = #tpu.pipeline_mode<synchronous>, transform_indices = @transform_1, window_bounds = array<i64: 1, 128>}, {pipeline_mode = #tpu.pipeline_mode<synchronous>, transform_indices = @transform_2, window_bounds = array<i64: 1, 128>}, {transform_indices = @transform_3, window_bounds = array<i64: 1024, 128>}]} {
    %c0 = arith.constant 0 : index
    %c0_0 = arith.constant 0 : index
    %0 = vector.load %arg1[%c0, %c0_0] : memref<1024x128xf32, #tpu.memory_space<vmem>>, vector<1024x128xf32>
    %c0_1 = arith.constant 0 : index
    %c0_2 = arith.constant 0 : index
    %1 = vector.load %arg2[%c0_1, %c0_2] : memref<1x128xf32, #tpu.memory_space<vmem>>, vector<1x128xf32>
    %2 = vector.broadcast %1 : vector<1x128xf32> to vector<1024x128xf32>
    %3 = arith.mulf %0, %2 : vector<1024x128xf32>
    %c0_3 = arith.constant 0 : index
    %c0_4 = arith.constant 0 : index
    %4 = vector.load %arg3[%c0_3, %c0_4] : memref<1x128xf32, #tpu.memory_space<vmem>>, vector<1x128xf32>
    %5 = vector.broadcast %4 : vector<1x128xf32> to vector<1024x128xf32>
    %6 = arith.addf %3, %5 : vector<1024x128xf32>
    %cst = arith.constant 0.000000e+00 : f32
    %7 = vector.broadcast %cst : f32 to vector<1024x128xf32>
    %8 = arith.cmpf oge, %6, %7 : vector<1024x128xf32>
    %cst_5 = arith.constant 1.000000e+00 : f32
    %9 = vector.broadcast %cst_5 : f32 to vector<1024x128xf32>
    %10 = arith.mulf %9, %6 : vector<1024x128xf32>
    %11 = arith.select %8, %6, %10 : vector<1024x128xi1>, vector<1024x128xf32>
    %c0_6 = arith.constant 0 : index
    %c0_7 = arith.constant 0 : index
    %12 = vector.load %arg4[%c0_6, %c0_7] : memref<1024x128xf32, #tpu.memory_space<vmem>>, vector<1024x128xf32>
    tpu.vector_store %arg4[%c0_6, %c0_7], %11 {strides = array<i32>} : memref<1024x128xf32, #tpu.memory_space<vmem>>, vector<1024x128xf32>,
    return
  }
  func.func @transform_0(%arg0: i32) -> (i32, i32) {
    %c0_i32 = arith.constant 0 : i32
    %c0_i32_0 = arith.constant 0 : i32
    return %arg0, %c0_i32 : i32, i32
  }
  func.func @transform_1(%arg0: i32) -> (i32, i32) {
    %c0_i32 = arith.constant 0 : i32
    %c0_i32_0 = arith.constant 0 : i32
    %c0_i32_1 = arith.constant 0 : i32
    return %c0_i32, %c0_i32_0 : i32, i32
  }
  func.func @transform_2(%arg0: i32) -> (i32, i32) {
    %c0_i32 = arith.constant 0 : i32
    %c0_i32_0 = arith.constant 0 : i32
    %c0_i32_1 = arith.constant 0 : i32
    return %c0_i32, %c0_i32_0 : i32, i32
  }
  func.func @transform_3(%arg0: i32) -> (i32, i32) {
    %c0_i32 = arith.constant 0 : i32
    %c0_i32_0 = arith.constant 0 : i32
    return %arg0, %c0_i32 : i32, i32
  }
}

</mosaic_0001>

<llo_original>
// kernel: conv3d_custom_forward.3
$region0: #{conv3d_custom_forward.3}
  #allocation0 [shape = 'u32[]', space=smem, size = 0x4, offset = 0x4, fixed_abs, tag = 'smem constant byte address 0x4 - core index']
  #allocation1 [shape = 'u32[144,128]{1,0:T(1,128)}', space=vmem, size = 0x12000, scoped, tag = 'internal scratch']
  %s0 = inlined_call_operand.vmem [shape: f32[1024,128], index: 0, kind: input, shape index: {}, may-alias: {0,3}]
  %s1 = inlined_call_operand.vmem [shape: f32[1,128], index: 1, kind: input, shape index: {}]
  %s2 = inlined_call_operand.vmem [shape: f32[1,128], index: 2, kind: input, shape index: {}]
  %s3 = inlined_call_operand.vmem [shape: f32[1024,128], index: 3, kind: output, shape index: {}, may-alias: {0,3}]
  %s4 = sld [smem:[#allocation0]]
  $region22: #{conv3d_custom_forward.3} parent=0
    _
  %s6 = ssub.s32 1, %s4
  %s7 = scalar_select 0, %s6, %s4
  // Predicated region
  $region2: #{conv3d_custom_forward.3} parent=0 // pred_check
    _
  $region3: #{conv3d_custom_forward.3} parent=0 // pred_check_branch
    %9 = sbr.rel (0) target = $region5
  $region4: #{conv3d_custom_forward.3} parent=0 // pred_region
    _
  $region5: #{conv3d_custom_forward.3} parent=0 // pred_fallthru
    _
  // Predicated region
  $region6: #{conv3d_custom_forward.3} parent=0 // pred_check
    _
  $region7: #{conv3d_custom_forward.3} parent=0 // pred_check_branch
    %11 = sbr.rel (0) target = $region9
  $region8: #{conv3d_custom_forward.3} parent=0 // pred_region
    _
  $region9: #{conv3d_custom_forward.3} parent=0 // pred_fallthru
    _
  // Predicated region
  $region10: #{conv3d_custom_forward.3} parent=0 // pred_check
    _
  $region11: #{conv3d_custom_forward.3} parent=0 // pred_check_branch
    %13 = sbr.rel (0) target = $region13
  $region12: #{conv3d_custom_forward.3} parent=0 // pred_region
    _
  $region13: #{conv3d_custom_forward.3} parent=0 // pred_fallthru
    _
  %v14 = vld [vmem:[%s0] sm:$0xff]
  %v15 = vld [vmem:[%s0 + $0x8] sm:$0xff]
  %v16 = vld [vmem:[%s0 + $0x10] sm:$0xff]
  %v17 = vld [vmem:[%s0 + $0x18] sm:$0xff]
  %v18 = vld [vmem:[%s0 + $0x20] sm:$0xff]
  %v19 = vld [vmem:[%s0 + $0x28] sm:$0xff]
  %v20 = vld [vmem:[%s0 + $0x30] sm:$0xff]
  %v21 = vld [vmem:[%s0 + $0x38] sm:$0xff]
  %v22 = vld [vmem:[%s0 + $0x40] sm:$0xff]
  %v23 = vld [vmem:[%s0 + $0x48] sm:$0xff]
  %v24 = vld [vmem:[%s0 + $0x50] sm:$0xff]
  %v25 = vld [vmem:[%s0 + $0x58] sm:$0xff]
  %v26 = vld [vmem:[%s0 + $0x60] sm:$0xff]
  %v27 = vld [vmem:[%s0 + $0x68] sm:$0xff]
  %v28 = vld [vmem:[%s0 + $0x70] sm:$0xff]
  %v29 = vld [vmem:[%s0 + $0x78] sm:$0xff]
  %v30 = vld [vmem:[%s0 + $0x80] sm:$0xff]
  %v31 = vld [vmem:[%s0 + $0x88] sm:$0xff]
  %v32 = vld [vmem:[%s0 + $0x90] sm:$0xff]
  %v33 = vld [vmem:[%s0 + $0x98] sm:$0xff]
  %v34 = vld [vmem:[%s0 + $0xa0] sm:$0xff]
  %v35 = vld [vmem:[%s0 + $0xa8] sm:$0xff]
  %v36 = vld [vmem:[%s0 + $0xb0] sm:$0xff]
  %v37 = vld [vmem:[%s0 + $0xb8] sm:$0xff]
  %v38 = vld [vmem:[%s0 + $0xc0] sm:$0xff]
  %v39 = vld [vmem:[%s0 + $0xc8] sm:$0xff]
  %v40 = vld [vmem:[%s0 + $0xd0] sm:$0xff]
  %v41 = vld [vmem:[%s0 + $0xd8] sm:$0xff]
  %v42 = vld [vmem:[%s0 + $0xe0] sm:$0xff]
  %v43 = vld [vmem:[%s0 + $0xe8] sm:$0xff]
  %v44 = vld [vmem:[%s0 + $0xf0] sm:$0xff]
  %v45 = vld [vmem:[%s0 + $0xf8] sm:$0xff]
  %v46 = vld [vmem:[%s0 + $0x100] sm:$0xff]
  %v47 = vld [vmem:[%s0 + $0x108] sm:$0xff]
  %v48 = vld [vmem:[%s0 + $0x110] sm:$0xff]
  %v49 = vld [vmem:[%s0 + $0x118] sm:$0xff]
  %v50 = vld [vmem:[%s0 + $0x120] sm:$0xff]
  %v51 = vld [vmem:[%s0 + $0x128] sm:$0xff]
  %v52 = vld [vmem:[%s0 + $0x130] sm:$0xff]
  %v53 = vld [vmem:[%s0 + $0x138] sm:$0xff]
  %v54 = vld [vmem:[%s0 + $0x140] sm:$0xff]
  %v55 = vld [vmem:[%s0 + $0x148] sm:$0xff]
  %v56 = vld [vmem:[%s0 + $0x150] sm:$0xff]
  %v57 = vld [vmem:[%s0 + $0x158] sm:$0xff]
  %v58 = vld [vmem:[%s0 + $0x160] sm:$0xff]
  %v59 = vld [vmem:[%s0 + $0x168] sm:$0xff]
  %v60 = vld [vmem:[%s0 + $0x170] sm:$0xff]
  %v61 = vld [vmem:[%s0 + $0x178] sm:$0xff]
  %v62 = vld [vmem:[%s0 + $0x180] sm:$0xff]
  %v63 = vld [vmem:[%s0 + $0x188] sm:$0xff]
  %v64 = vld [vmem:[%s0 + $0x190] sm:$0xff]
  %v65 = vld [vmem:[%s0 + $0x198] sm:$0xff]
  %v66 = vld [vmem:[%s0 + $0x1a0] sm:$0xff]
  %v67 = vld [vmem:[%s0 + $0x1a8] sm:$0xff]
  %v68 = vld [vmem:[%s0 + $0x1b0] sm:$0xff]
  %v69 = vld [vmem:[%s0 + $0x1b8] sm:$0xff]
  %v70 = vld [vmem:[%s0 + $0x1c0] sm:$0xff]
  %v71 = vld [vmem:[%s0 + $0x1c8] sm:$0xff]
  %v72 = vld [vmem:[%s0 + $0x1d0] sm:$0xff]
  %v73 = vld [vmem:[%s0 + $0x1d8] sm:$0xff]
  %v74 = vld [vmem:[%s0 + $0x1e0] sm:$0xff]
  %v75 = vld [vmem:[%s0 + $0x1e8] sm:$0xff]
  %v76 = vld [vmem:[%s0 + $0x1f0] sm:$0xff]
  %v77 = vld [vmem:[%s0 + $0x1f8] sm:$0xff]
  %v78 = vld [vmem:[%s0 + $0x200] sm:$0xff]
  %v79 = vld [vmem:[%s0 + $0x208] sm:$0xff]
  %v80 = vld [vmem:[%s0 + $0x210] sm:$0xff]
  %v81 = vld [vmem:[%s0 + $0x218] sm:$0xff]
  %v82 = vld [vmem:[%s0 + $0x220] sm:$0xff]
  %v83 = vld [vmem:[%s0 + $0x228] sm:$0xff]
  %v84 = vld [vmem:[%s0 + $0x230] sm:$0xff]
  %v85 = vld [vmem:[%s0 + $0x238] sm:$0xff]
  %v86 = vld [vmem:[%s0 + $0x240] sm:$0xff]
  %v87 = vld [vmem:[%s0 + $0x248] sm:$0xff]
  %v88 = vld [vmem:[%s0 + $0x250] sm:$0xff]
  %v89 = vld [vmem:[%s0 + $0x258] sm:$0xff]
  %v90 = vld [vmem:[%s0 + $0x260] sm:$0xff]
  %v91 = vld [vmem:[%s0 + $0x268] sm:$0xff]
  %v92 = vld [vmem:[%s0 + $0x270] sm:$0xff]
  %v93 = vld [vmem:[%s0 + $0x278] sm:$0xff]
  %v94 = vld [vmem:[%s0 + $0x280] sm:$0xff]
  %v95 = vld [vmem:[%s0 + $0x288] sm:$0xff]
  %v96 = vld [vmem:[%s0 + $0x290] sm:$0xff]
  %v97 = vld [vmem:[%s0 + $0x298] sm:$0xff]
  %v98 = vld [vmem:[%s0 + $0x2a0] sm:$0xff]
  %v99 = vld [vmem:[%s0 + $0x2a8] sm:$0xff]
  %v100 = vld [vmem:[%s0 + $0x2b0] sm:$0xff]
  %v101 = vld [vmem:[%s0 + $0x2b8] sm:$0xff]
  %v102 = vld [vmem:[%s0 + $0x2c0] sm:$0xff]
  %v103 = vld [vmem:[%s0 + $0x2c8] sm:$0xff]
  %v104 = vld [vmem:[%s0 + $0x2d0] sm:$0xff]
  %v105 = vld [vmem:[%s0 + $0x2d8] sm:$0xff]
  %v106 = vld [vmem:[%s0 + $0x2e0] sm:$0xff]
  %v107 = vld [vmem:[%s0 + $0x2e8] sm:$0xff]
  %v108 = vld [vmem:[%s0 + $0x2f0] sm:$0xff]
  %v109 = vld [vmem:[%s0 + $0x2f8] sm:$0xff]
  %v110 = vld [vmem:[%s0 + $0x300] sm:$0xff]
  %v111 = vld [vmem:[%s0 + $0x308] sm:$0xff]
  %v112 = vld [vmem:[%s0 + $0x310] sm:$0xff]
  %v113 = vld [vmem:[%s0 + $0x318] sm:$0xff]
  %v114 = vld [vmem:[%s0 + $0x320] sm:$0xff]
  %v115 = vld [vmem:[%s0 + $0x328] sm:$0xff]
  %v116 = vld [vmem:[%s0 + $0x330] sm:$0xff]
  %v117 = vld [vmem:[%s0 + $0x338] sm:$0xff]
  %v118 = vld [vmem:[%s0 + $0x340] sm:$0xff]
  %v119 = vld [vmem:[%s0 + $0x348] sm:$0xff]
  %v120 = vld [vmem:[%s0 + $0x350] sm:$0xff]
  %v121 = vld [vmem:[%s0 + $0x358] sm:$0xff]
  %v122 = vld [vmem:[%s0 + $0x360] sm:$0xff]
  %v123 = vld [vmem:[%s0 + $0x368] sm:$0xff]
  %v124 = vld [vmem:[%s0 + $0x370] sm:$0xff]
  %v125 = vld [vmem:[%s0 + $0x378] sm:$0xff]
  %v126 = vld [vmem:[%s0 + $0x380] sm:$0xff]
  %v127 = vld [vmem:[%s0 + $0x388] sm:$0xff]
  %v128 = vld [vmem:[%s0 + $0x390] sm:$0xff]
  %v129 = vld [vmem:[%s0 + $0x398] sm:$0xff]
  %v130 = vld [vmem:[%s0 + $0x3a0] sm:$0xff]
  %v131 = vld [vmem:[%s0 + $0x3a8] sm:$0xff]
  %v132 = vld [vmem:[%s0 + $0x3b0] sm:$0xff]
  %v133 = vld [vmem:[%s0 + $0x3b8] sm:$0xff]
  %v134 = vld [vmem:[%s0 + $0x3c0] sm:$0xff]
  %v135 = vld [vmem:[%s0 + $0x3c8] sm:$0xff]
  %v136 = vld [vmem:[%s0 + $0x3d0] sm:$0xff]
  %v137 = vld [vmem:[%s0 + $0x3d8] sm:$0xff]
  %v138 = vld [vmem:[%s0 + $0x3e0] sm:$0xff]
  %v139 = vld [vmem:[%s0 + $0x3e8] sm:$0xff]
  %v140 = vld [vmem:[%s0 + $0x3f0] sm:$0xff]
  %v141 = vld [vmem:[%s0 + $0x3f8] sm:$0xff]
  %v142 = vld [vmem:[%s1] sm:$0x1]
  %v144 = vlaneseq
  %v145 = vshrl.u32 %v144, 7
  %v146 = vsub.s32 0, %v145
  %v147 = vrot.slane %v142, %v146
  %v149 = vmul.f32 %v14, %v147
  %v150 = vmul.f32 %v15, %v147
  %v151 = vmul.f32 %v16, %v147
  %v152 = vmul.f32 %v17, %v147
  %v153 = vmul.f32 %v18, %v147
  %v154 = vmul.f32 %v19, %v147
  %v155 = vmul.f32 %v20, %v147
  %v156 = vmul.f32 %v21, %v147
  %v157 = vmul.f32 %v22, %v147
  %v158 = vmul.f32 %v23, %v147
  %v159 = vmul.f32 %v24, %v147
  %v160 = vmul.f32 %v25, %v147
  %v161 = vmul.f32 %v26, %v147
  %v162 = vmul.f32 %v27, %v147
  %v163 = vmul.f32 %v28, %v147
  %v164 = vmul.f32 %v29, %v147
  %v165 = vmul.f32 %v30, %v147
  %v166 = vmul.f32 %v31, %v147
  %v167 = vmul.f32 %v32, %v147
  %v168 = vmul.f32 %v33, %v147
  %v169 = vmul.f32 %v34, %v147
  %v170 = vmul.f32 %v35, %v147
  %v171 = vmul.f32 %v36, %v147
  %v172 = vmul.f32 %v37, %v147
  %v173 = vmul.f32 %v38, %v147
  %v174 = vmul.f32 %v39, %v147
  %v175 = vmul.f32 %v40, %v147
  %v176 = vmul.f32 %v41, %v147
  %v177 = vmul.f32 %v42, %v147
  %v178 = vmul.f32 %v43, %v147
  %v179 = vmul.f32 %v44, %v147
  %v180 = vmul.f32 %v45, %v147
  %v181 = vmul.f32 %v46, %v147
  %v182 = vmul.f32 %v47, %v147
  %v183 = vmul.f32 %v48, %v147
  %v184 = vmul.f32 %v49, %v147
  %v185 = vmul.f32 %v50, %v147
  %v186 = vmul.f32 %v51, %v147
  %v187 = vmul.f32 %v52, %v147
  %v188 = vmul.f32 %v53, %v147
  %v189 = vmul.f32 %v54, %v147
  %v190 = vmul.f32 %v55, %v147
  %v191 = vmul.f32 %v56, %v147
  %v192 = vmul.f32 %v57, %v147
  %v193 = vmul.f32 %v58, %v147
  %v194 = vmul.f32 %v59, %v147
  %v195 = vmul.f32 %v60, %v147
  %v196 = vmul.f32 %v61, %v147
  %v197 = vmul.f32 %v62, %v147
  %v198 = vmul.f32 %v63, %v147
  %v199 = vmul.f32 %v64, %v147
  %v200 = vmul.f32 %v65, %v147
  %v201 = vmul.f32 %v66, %v147
  %v202 = vmul.f32 %v67, %v147
  %v203 = vmul.f32 %v68, %v147
  %v204 = vmul.f32 %v69, %v147
  %v205 = vmul.f32 %v70, %v147
  %v206 = vmul.f32 %v71, %v147
  %v207 = vmul.f32 %v72, %v147
  %v208 = vmul.f32 %v73, %v147
  %v209 = vmul.f32 %v74, %v147
  %v210 = vmul.f32 %v75, %v147
  %v211 = vmul.f32 %v76, %v147
  %v212 = vmul.f32 %v77, %v147
  %v213 = vmul.f32 %v78, %v147
  %v214 = vmul.f32 %v79, %v147
  %v215 = vmul.f32 %v80, %v147
  %v216 = vmul.f32 %v81, %v147
  %v217 = vmul.f32 %v82, %v147
  %v218 = vmul.f32 %v83, %v147
  %v219 = vmul.f32 %v84, %v147
  %v220 = vmul.f32 %v85, %v147
  %v221 = vmul.f32 %v86, %v147
  %v222 = vmul.f32 %v87, %v147
  %v223 = vmul.f32 %v88, %v147
  %v224 = vmul.f32 %v89, %v147
  %v225 = vmul.f32 %v90, %v147
  %v226 = vmul.f32 %v91, %v147
  %v227 = vmul.f32 %v92, %v147
  %v228 = vmul.f32 %v93, %v147
  %v229 = vmul.f32 %v94, %v147
  %v230 = vmul.f32 %v95, %v147
  %v231 = vmul.f32 %v96, %v147
  %v232 = vmul.f32 %v97, %v147
  %v233 = vmul.f32 %v98, %v147
  %v234 = vmul.f32 %v99, %v147
  %v235 = vmul.f32 %v100, %v147
  %v236 = vmul.f32 %v101, %v147
  %v237 = vmul.f32 %v102, %v147
  %v238 = vmul.f32 %v103, %v147
  %v239 = vmul.f32 %v104, %v147
  %v240 = vmul.f32 %v105, %v147
  %v241 = vmul.f32 %v106, %v147
  %v242 = vmul.f32 %v107, %v147
  %v243 = vmul.f32 %v108, %v147
  %v244 = vmul.f32 %v109, %v147
  %v245 = vmul.f32 %v110, %v147
  %v246 = vmul.f32 %v111, %v147
  %v247 = vmul.f32 %v112, %v147
  %v248 = vmul.f32 %v113, %v147
  %v249 = vmul.f32 %v114, %v147
  %v250 = vmul.f32 %v115, %v147
  %v251 = vmul.f32 %v116, %v147
  %v252 = vmul.f32 %v117, %v147
  %v253 = vmul.f32 %v118, %v147
  %v254 = vmul.f32 %v119, %v147
  %v255 = vmul.f32 %v120, %v147
  %v256 = vmul.f32 %v121, %v147
  %v257 = vmul.f32 %v122, %v147
  %v258 = vmul.f32 %v123, %v147
  %v259 = vmul.f32 %v124, %v147
  %v260 = vmul.f32 %v125, %v147
  %v261 = vmul.f32 %v126, %v147
  %v262 = vmul.f32 %v127, %v147
  %v263 = vmul.f32 %v128, %v147
  %v264 = vmul.f32 %v129, %v147
  %v265 = vmul.f32 %v130, %v147
  %v266 = vmul.f32 %v131, %v147
  %v267 = vmul.f32 %v132, %v147
  %v268 = vmul.f32 %v133, %v147
  %v269 = vmul.f32 %v134, %v147
  %v270 = vmul.f32 %v135, %v147
  %v271 = vmul.f32 %v136, %v147
  %v272 = vmul.f32 %v137, %v147
  %v273 = vmul.f32 %v138, %v147
  %v274 = vmul.f32 %v139, %v147
  %v275 = vmul.f32 %v140, %v147
  %v276 = vmul.f32 %v141, %v147
  %v277 = vld [vmem:[%s2] sm:$0x1]
  %v279 = vlaneseq
  %v280 = vshrl.u32 %v279, 7
  %v281 = vsub.s32 0, %v280
  %v282 = vrot.slane %v277, %v281
  %v284 = vadd.f32 %v149, %v282
  %v285 = vadd.f32 %v150, %v282
  %v286 = vadd.f32 %v151, %v282
  %v287 = vadd.f32 %v152, %v282
  %v288 = vadd.f32 %v153, %v282
  %v289 = vadd.f32 %v154, %v282
  %v290 = vadd.f32 %v155, %v282
  %v291 = vadd.f32 %v156, %v282
  %v292 = vadd.f32 %v157, %v282
  %v293 = vadd.f32 %v158, %v282
  %v294 = vadd.f32 %v159, %v282
  %v295 = vadd.f32 %v160, %v282
  %v296 = vadd.f32 %v161, %v282
  %v297 = vadd.f32 %v162, %v282
  %v298 = vadd.f32 %v163, %v282
  %v299 = vadd.f32 %v164, %v282
  %v300 = vadd.f32 %v165, %v282
  %v301 = vadd.f32 %v166, %v282
  %v302 = vadd.f32 %v167, %v282
  %v303 = vadd.f32 %v168, %v282
  %v304 = vadd.f32 %v169, %v282
  %v305 = vadd.f32 %v170, %v282
  %v306 = vadd.f32 %v171, %v282
  %v307 = vadd.f32 %v172, %v282
  %v308 = vadd.f32 %v173, %v282
  %v309 = vadd.f32 %v174, %v282
  %v310 = vadd.f32 %v175, %v282
  %v311 = vadd.f32 %v176, %v282
  %v312 = vadd.f32 %v177, %v282
  %v313 = vadd.f32 %v178, %v282
  %v314 = vadd.f32 %v179, %v282
  %v315 = vadd.f32 %v180, %v282
  %v316 = vadd.f32 %v181, %v282
  %v317 = vadd.f32 %v182, %v282
  %v318 = vadd.f32 %v183, %v282
  %v319 = vadd.f32 %v184, %v282
  %v320 = vadd.f32 %v185, %v282
  %v321 = vadd.f32 %v186, %v282
  %v322 = vadd.f32 %v187, %v282
  %v323 = vadd.f32 %v188, %v282
  %v324 = vadd.f32 %v189, %v282
  %v325 = vadd.f32 %v190, %v282
  %v326 = vadd.f32 %v191, %v282
  %v327 = vadd.f32 %v192, %v282
  %v328 = vadd.f32 %v193, %v282
  %v329 = vadd.f32 %v194, %v282
  %v330 = vadd.f32 %v195, %v282
  %v331 = vadd.f32 %v196, %v282
  %v332 = vadd.f32 %v197, %v282
  %v333 = vadd.f32 %v198, %v282
  %v334 = vadd.f32 %v199, %v282
  %v335 = vadd.f32 %v200, %v282
  %v336 = vadd.f32 %v201, %v282
  %v337 = vadd.f32 %v202, %v282
  %v338 = vadd.f32 %v203, %v282
  %v339 = vadd.f32 %v204, %v282
  %v340 = vadd.f32 %v205, %v282
  %v341 = vadd.f32 %v206, %v282
  %v342 = vadd.f32 %v207, %v282
  %v343 = vadd.f32 %v208, %v282
  %v344 = vadd.f32 %v209, %v282
  %v345 = vadd.f32 %v210, %v282
  %v346 = vadd.f32 %v211, %v282
  %v347 = vadd.f32 %v212, %v282
  %v348 = vadd.f32 %v213, %v282
  %v349 = vadd.f32 %v214, %v282
  %v350 = vadd.f32 %v215, %v282
  %v351 = vadd.f32 %v216, %v282
  %v352 = vadd.f32 %v217, %v282
  %v353 = vadd.f32 %v218, %v282
  %v354 = vadd.f32 %v219, %v282
  %v355 = vadd.f32 %v220, %v282
  %v356 = vadd.f32 %v221, %v282
  %v357 = vadd.f32 %v222, %v282
  %v358 = vadd.f32 %v223, %v282
  %v359 = vadd.f32 %v224, %v282
  %v360 = vadd.f32 %v225, %v282
  %v361 = vadd.f32 %v226, %v282
  %v362 = vadd.f32 %v227, %v282
  %v363 = vadd.f32 %v228, %v282
  %v364 = vadd.f32 %v229, %v282
  %v365 = vadd.f32 %v230, %v282
  %v366 = vadd.f32 %v231, %v282
  %v367 = vadd.f32 %v232, %v282
  %v368 = vadd.f32 %v233, %v282
  %v369 = vadd.f32 %v234, %v282
  %v370 = vadd.f32 %v235, %v282
  %v371 = vadd.f32 %v236, %v282
  %v372 = vadd.f32 %v237, %v282
  %v373 = vadd.f32 %v238, %v282
  %v374 = vadd.f32 %v239, %v282
  %v375 = vadd.f32 %v240, %v282
  %v376 = vadd.f32 %v241, %v282
  %v377 = vadd.f32 %v242, %v282
  %v378 = vadd.f32 %v243, %v282
  %v379 = vadd.f32 %v244, %v282
  %v380 = vadd.f32 %v245, %v282
  %v381 = vadd.f32 %v246, %v282
  %v382 = vadd.f32 %v247, %v282
  %v383 = vadd.f32 %v248, %v282
  %v384 = vadd.f32 %v249, %v282
  %v385 = vadd.f32 %v250, %v282
  %v386 = vadd.f32 %v251, %v282
  %v387 = vadd.f32 %v252, %v282
  %v388 = vadd.f32 %v253, %v282
  %v389 = vadd.f32 %v254, %v282
  %v390 = vadd.f32 %v255, %v282
  %v391 = vadd.f32 %v256, %v282
  %v392 = vadd.f32 %v257, %v282
  %v393 = vadd.f32 %v258, %v282
  %v394 = vadd.f32 %v259, %v282
  %v395 = vadd.f32 %v260, %v282
  %v396 = vadd.f32 %v261, %v282
  %v397 = vadd.f32 %v262, %v282
  %v398 = vadd.f32 %v263, %v282
  %v399 = vadd.f32 %v264, %v282
  %v400 = vadd.f32 %v265, %v282
  %v401 = vadd.f32 %v266, %v282
  %v402 = vadd.f32 %v267, %v282
  %v403 = vadd.f32 %v268, %v282
  %v404 = vadd.f32 %v269, %v282
  %v405 = vadd.f32 %v270, %v282
  %v406 = vadd.f32 %v271, %v282
  %v407 = vadd.f32 %v272, %v282
  %v408 = vadd.f32 %v273, %v282
  %v409 = vadd.f32 %v274, %v282
  %v410 = vadd.f32 %v275, %v282
  %v411 = vadd.f32 %v276, %v282
  %412 = vst [vmem:[%s3] sm:$0xff] %v284
  %413 = vst [vmem:[%s3 + $0x8] sm:$0xff] %v285
  %414 = vst [vmem:[%s3 + $0x10] sm:$0xff] %v286
  %415 = vst [vmem:[%s3 + $0x18] sm:$0xff] %v287
  %416 = vst [vmem:[%s3 + $0x20] sm:$0xff] %v288
  %417 = vst [vmem:[%s3 + $0x28] sm:$0xff] %v289
  %418 = vst [vmem:[%s3 + $0x30] sm:$0xff] %v290
  %419 = vst [vmem:[%s3 + $0x38] sm:$0xff] %v291
  %420 = vst [vmem:[%s3 + $0x40] sm:$0xff] %v292
  %421 = vst [vmem:[%s3 + $0x48] sm:$0xff] %v293
  %422 = vst [vmem:[%s3 + $0x50] sm:$0xff] %v294
  %423 = vst [vmem:[%s3 + $0x58] sm:$0xff] %v295
  %424 = vst [vmem:[%s3 + $0x60] sm:$0xff] %v296
  %425 = vst [vmem:[%s3 + $0x68] sm:$0xff] %v297
  %426 = vst [vmem:[%s3 + $0x70] sm:$0xff] %v298
  %427 = vst [vmem:[%s3 + $0x78] sm:$0xff] %v299
  %428 = vst [vmem:[%s3 + $0x80] sm:$0xff] %v300
  %429 = vst [vmem:[%s3 + $0x88] sm:$0xff] %v301
  %430 = vst [vmem:[%s3 + $0x90] sm:$0xff] %v302
  %431 = vst [vmem:[%s3 + $0x98] sm:$0xff] %v303
  %432 = vst [vmem:[%s3 + $0xa0] sm:$0xff] %v304
  %433 = vst [vmem:[%s3 + $0xa8] sm:$0xff] %v305
  %434 = vst [vmem:[%s3 + $0xb0] sm:$0xff] %v306
  %435 = vst [vmem:[%s3 + $0xb8] sm:$0xff] %v307
  %436 = vst [vmem:[%s3 + $0xc0] sm:$0xff] %v308
  %437 = vst [vmem:[%s3 + $0xc8] sm:$0xff] %v309
  %438 = vst [vmem:[%s3 + $0xd0] sm:$0xff] %v310
  %439 = vst [vmem:[%s3 + $0xd8] sm:$0xff] %v311
  %440 = vst [vmem:[%s3 + $0xe0] sm:$0xff] %v312
  %441 = vst [vmem:[%s3 + $0xe8] sm:$0xff] %v313
  %442 = vst [vmem:[%s3 + $0xf0] sm:$0xff] %v314
  %443 = vst [vmem:[%s3 + $0xf8] sm:$0xff] %v315
  %444 = vst [vmem:[%s3 + $0x100] sm:$0xff] %v316
  %445 = vst [vmem:[%s3 + $0x108] sm:$0xff] %v317
  %446 = vst [vmem:[%s3 + $0x110] sm:$0xff] %v318
  %447 = vst [vmem:[%s3 + $0x118] sm:$0xff] %v319
  %448 = vst [vmem:[%s3 + $0x120] sm:$0xff] %v320
  %449 = vst [vmem:[%s3 + $0x128] sm:$0xff] %v321
  %450 = vst [vmem:[%s3 + $0x130] sm:$0xff] %v322
  %451 = vst [vmem:[%s3 + $0x138] sm:$0xff] %v323
  %452 = vst [vmem:[%s3 + $0x140] sm:$0xff] %v324
  %453 = vst [vmem:[%s3 + $0x148] sm:$0xff] %v325
  %454 = vst [vmem:[%s3 + $0x150] sm:$0xff] %v326
  %455 = vst [vmem:[%s3 + $0x158] sm:$0xff] %v327
  %456 = vst [vmem:[%s3 + $0x160] sm:$0xff] %v328
  %457 = vst [vmem:[%s3 + $0x168] sm:$0xff] %v329
  %458 = vst [vmem:[%s3 + $0x170] sm:$0xff] %v330
  %459 = vst [vmem:[%s3 + $0x178] sm:$0xff] %v331
  %460 = vst [vmem:[%s3 + $0x180] sm:$0xff] %v332
  %461 = vst [vmem:[%s3 + $0x188] sm:$0xff] %v333
  %462 = vst [vmem:[%s3 + $0x190] sm:$0xff] %v334
  %463 = vst [vmem:[%s3 + $0x198] sm:$0xff] %v335
  %464 = vst [vmem:[%s3 + $0x1a0] sm:$0xff] %v336
  %465 = vst [vmem:[%s3 + $0x1a8] sm:$0xff] %v337
  %466 = vst [vmem:[%s3 + $0x1b0] sm:$0xff] %v338
  %467 = vst [vmem:[%s3 + $0x1b8] sm:$0xff] %v339
  %468 = vst [vmem:[%s3 + $0x1c0] sm:$0xff] %v340
  %469 = vst [vmem:[%s3 + $0x1c8] sm:$0xff] %v341
  %470 = vst [vmem:[%s3 + $0x1d0] sm:$0xff] %v342
  %471 = vst [vmem:[%s3 + $0x1d8] sm:$0xff] %v343
  %472 = vst [vmem:[%s3 + $0x1e0] sm:$0xff] %v344
  %473 = vst [vmem:[%s3 + $0x1e8] sm:$0xff] %v345
  %474 = vst [vmem:[%s3 + $0x1f0] sm:$0xff] %v346
  %475 = vst [vmem:[%s3 + $0x1f8] sm:$0xff] %v347
  %476 = vst [vmem:[%s3 + $0x200] sm:$0xff] %v348
  %477 = vst [vmem:[%s3 + $0x208] sm:$0xff] %v349
  %478 = vst [vmem:[%s3 + $0x210] sm:$0xff] %v350
  %479 = vst [vmem:[%s3 + $0x218] sm:$0xff] %v351
  %480 = vst [vmem:[%s3 + $0x220] sm:$0xff] %v352
  %481 = vst [vmem:[%s3 + $0x228] sm:$0xff] %v353
  %482 = vst [vmem:[%s3 + $0x230] sm:$0xff] %v354
  %483 = vst [vmem:[%s3 + $0x238] sm:$0xff] %v355
  %484 = vst [vmem:[%s3 + $0x240] sm:$0xff] %v356
  %485 = vst [vmem:[%s3 + $0x248] sm:$0xff] %v357
  %486 = vst [vmem:[%s3 + $0x250] sm:$0xff] %v358
  %487 = vst [vmem:[%s3 + $0x258] sm:$0xff] %v359
  %488 = vst [vmem:[%s3 + $0x260] sm:$0xff] %v360
  %489 = vst [vmem:[%s3 + $0x268] sm:$0xff] %v361
  %490 = vst [vmem:[%s3 + $0x270] sm:$0xff] %v362
  %491 = vst [vmem:[%s3 + $0x278] sm:$0xff] %v363
  %492 = vst [vmem:[%s3 + $0x280] sm:$0xff] %v364
  %493 = vst [vmem:[%s3 + $0x288] sm:$0xff] %v365
  %494 = vst [vmem:[%s3 + $0x290] sm:$0xff] %v366
  %495 = vst [vmem:[%s3 + $0x298] sm:$0xff] %v367
  %496 = vst [vmem:[%s3 + $0x2a0] sm:$0xff] %v368
  %497 = vst [vmem:[%s3 + $0x2a8] sm:$0xff] %v369
  %498 = vst [vmem:[%s3 + $0x2b0] sm:$0xff] %v370
  %499 = vst [vmem:[%s3 + $0x2b8] sm:$0xff] %v371
  %500 = vst [vmem:[%s3 + $0x2c0] sm:$0xff] %v372
  %501 = vst [vmem:[%s3 + $0x2c8] sm:$0xff] %v373
  %502 = vst [vmem:[%s3 + $0x2d0] sm:$0xff] %v374
  %503 = vst [vmem:[%s3 + $0x2d8] sm:$0xff] %v375
  %504 = vst [vmem:[%s3 + $0x2e0] sm:$0xff] %v376
  %505 = vst [vmem:[%s3 + $0x2e8] sm:$0xff] %v377
  %506 = vst [vmem:[%s3 + $0x2f0] sm:$0xff] %v378
  %507 = vst [vmem:[%s3 + $0x2f8] sm:$0xff] %v379
  %508 = vst [vmem:[%s3 + $0x300] sm:$0xff] %v380
  %509 = vst [vmem:[%s3 + $0x308] sm:$0xff] %v381
  %510 = vst [vmem:[%s3 + $0x310] sm:$0xff] %v382
  %511 = vst [vmem:[%s3 + $0x318] sm:$0xff] %v383
  %512 = vst [vmem:[%s3 + $0x320] sm:$0xff] %v384
  %513 = vst [vmem:[%s3 + $0x328] sm:$0xff] %v385
  %514 = vst [vmem:[%s3 + $0x330] sm:$0xff] %v386
  %515 = vst [vmem:[%s3 + $0x338] sm:$0xff] %v387
  %516 = vst [vmem:[%s3 + $0x340] sm:$0xff] %v388
  %517 = vst [vmem:[%s3 + $0x348] sm:$0xff] %v389
  %518 = vst [vmem:[%s3 + $0x350] sm:$0xff] %v390
  %519 = vst [vmem:[%s3 + $0x358] sm:$0xff] %v391
  %520 = vst [vmem:[%s3 + $0x360] sm:$0xff] %v392
  %521 = vst [vmem:[%s3 + $0x368] sm:$0xff] %v393
  %522 = vst [vmem:[%s3 + $0x370] sm:$0xff] %v394
  %523 = vst [vmem:[%s3 + $0x378] sm:$0xff] %v395
  %524 = vst [vmem:[%s3 + $0x380] sm:$0xff] %v396
  %525 = vst [vmem:[%s3 + $0x388] sm:$0xff] %v397
  %526 = vst [vmem:[%s3 + $0x390] sm:$0xff] %v398
  %527 = vst [vmem:[%s3 + $0x398] sm:$0xff] %v399
  %528 = vst [vmem:[%s3 + $0x3a0] sm:$0xff] %v400
  %529 = vst [vmem:[%s3 + $0x3a8] sm:$0xff] %v401
  %530 = vst [vmem:[%s3 + $0x3b0] sm:$0xff] %v402
  %531 = vst [vmem:[%s3 + $0x3b8] sm:$0xff] %v403
  %532 = vst [vmem:[%s3 + $0x3c0] sm:$0xff] %v404
  %533 = vst [vmem:[%s3 + $0x3c8] sm:$0xff] %v405
  %534 = vst [vmem:[%s3 + $0x3d0] sm:$0xff] %v406
  %535 = vst [vmem:[%s3 + $0x3d8] sm:$0xff] %v407
  %536 = vst [vmem:[%s3 + $0x3e0] sm:$0xff] %v408
  %537 = vst [vmem:[%s3 + $0x3e8] sm:$0xff] %v409
  %538 = vst [vmem:[%s3 + $0x3f0] sm:$0xff] %v410
  %539 = vst [vmem:[%s3 + $0x3f8] sm:$0xff] %v411
  // Predicated region
  $region14: #{conv3d_custom_forward.3} parent=0 // pred_check
    _
  $region15: #{conv3d_custom_forward.3} parent=0 // pred_check_branch
    %541 = sbr.rel (0) target = $region17
  $region16: #{conv3d_custom_forward.3} parent=0 // pred_region
    _
  $region17: #{conv3d_custom_forward.3} parent=0 // pred_fallthru
    _
  // Predicated region
  $region18: #{conv3d_custom_forward.3} parent=0 // pred_check
    _
  $region19: #{conv3d_custom_forward.3} parent=0 // pred_check_branch
    %543 = sbr.rel (0) target = $region21
  $region20: #{conv3d_custom_forward.3} parent=0 // pred_region
    _
  $region21: #{conv3d_custom_forward.3} parent=0 // pred_fallthru
    _

// kernel: conv3d_custom_forward.2
$region0: #{conv3d_custom_forward.2}
  #allocation0 [shape = 'u32[]', space=smem, size = 0x4, offset = 0x4, fixed_abs, tag = 'smem constant byte address 0x4 - core index']
  #allocation1 [shape = 'u32[144,128]{1,0:T(1,128)}', space=vmem, size = 0x12000, scoped, tag = 'internal scratch']
  %s0 = inlined_call_operand.vmem [shape: bf16[1024,128], index: 0, kind: input, shape index: {}]
  %s1 = inlined_call_operand.vmem [shape: bf16[128,128], index: 1, kind: input, shape index: {}]
  %s2 = inlined_call_operand.vmem [shape: f32[1,128], index: 2, kind: input, shape index: {}]
  %s3 = inlined_call_operand.vmem [shape: f32[1024,128], index: 3, kind: output, shape index: {0}]
  %s4 = inlined_call_operand.vmem [shape: f32[1,2,128], index: 4, kind: output, shape index: {1}]
  %5 = xla_tuple %s3, %s4
  %s6 = sld [smem:[#allocation0]]
  $region30: #{conv3d_custom_forward.2} parent=0
    _
  %s8 = ssub.s32 1, %s6
  %s9 = scalar_select 0, %s8, %s6
  // Predicated region
  $region2: #{conv3d_custom_forward.2} parent=0 // pred_check
    _
  $region3: #{conv3d_custom_forward.2} parent=0 // pred_check_branch
    %11 = sbr.rel (0) target = $region5
  $region4: #{conv3d_custom_forward.2} parent=0 // pred_region
    _
  $region5: #{conv3d_custom_forward.2} parent=0 // pred_fallthru
    _
  // Predicated region
  $region6: #{conv3d_custom_forward.2} parent=0 // pred_check
    _
  $region7: #{conv3d_custom_forward.2} parent=0 // pred_check_branch
    %13 = sbr.rel (0) target = $region9
  $region8: #{conv3d_custom_forward.2} parent=0 // pred_region
    _
  $region9: #{conv3d_custom_forward.2} parent=0 // pred_fallthru
    _
  // Predicated region
  $region10: #{conv3d_custom_forward.2} parent=0 // pred_check
    _
  $region11: #{conv3d_custom_forward.2} parent=0 // pred_check_branch
    %15 = sbr.rel (0) target = $region13
  $region12: #{conv3d_custom_forward.2} parent=0 // pred_region
    _
  $region13: #{conv3d_custom_forward.2} parent=0 // pred_fallthru
    _
  %v17 = vld [vmem:[%s0] sm:$0xf]
  %v18 = vld [vmem:[%s0 + $0x4] sm:$0xf]
  %v19 = vld [vmem:[%s0 + $0x8] sm:$0xf]
  %v20 = vld [vmem:[%s0 + $0xc] sm:$0xf]
  %v21 = vld [vmem:[%s0 + $0x10] sm:$0xf]
  %v22 = vld [vmem:[%s0 + $0x14] sm:$0xf]
  %v23 = vld [vmem:[%s0 + $0x18] sm:$0xf]
  %v24 = vld [vmem:[%s0 + $0x1c] sm:$0xf]
  %v25 = vld [vmem:[%s0 + $0x20] sm:$0xf]
  %v26 = vld [vmem:[%s0 + $0x24] sm:$0xf]
  %v27 = vld [vmem:[%s0 + $0x28] sm:$0xf]
  %v28 = vld [vmem:[%s0 + $0x2c] sm:$0xf]
  %v29 = vld [vmem:[%s0 + $0x30] sm:$0xf]
  %v30 = vld [vmem:[%s0 + $0x34] sm:$0xf]
  %v31 = vld [vmem:[%s0 + $0x38] sm:$0xf]
  %v32 = vld [vmem:[%s0 + $0x3c] sm:$0xf]
  %v33 = vld [vmem:[%s0 + $0x40] sm:$0xf]
  %v34 = vld [vmem:[%s0 + $0x44] sm:$0xf]
  %v35 = vld [vmem:[%s0 + $0x48] sm:$0xf]
  %v36 = vld [vmem:[%s0 + $0x4c] sm:$0xf]
  %v37 = vld [vmem:[%s0 + $0x50] sm:$0xf]
  %v38 = vld [vmem:[%s0 + $0x54] sm:$0xf]
  %v39 = vld [vmem:[%s0 + $0x58] sm:$0xf]
  %v40 = vld [vmem:[%s0 + $0x5c] sm:$0xf]
  %v41 = vld [vmem:[%s0 + $0x60] sm:$0xf]
  %v42 = vld [vmem:[%s0 + $0x64] sm:$0xf]
  %v43 = vld [vmem:[%s0 + $0x68] sm:$0xf]
  %v44 = vld [vmem:[%s0 + $0x6c] sm:$0xf]
  %v45 = vld [vmem:[%s0 + $0x70] sm:$0xf]
  %v46 = vld [vmem:[%s0 + $0x74] sm:$0xf]
  %v47 = vld [vmem:[%s0 + $0x78] sm:$0xf]
  %v48 = vld [vmem:[%s0 + $0x7c] sm:$0xf]
  %v49 = vld [vmem:[%s0 + $0x80] sm:$0xf]
  %v50 = vld [vmem:[%s0 + $0x84] sm:$0xf]
  %v51 = vld [vmem:[%s0 + $0x88] sm:$0xf]
  %v52 = vld [vmem:[%s0 + $0x8c] sm:$0xf]
  %v53 = vld [vmem:[%s0 + $0x90] sm:$0xf]
  %v54 = vld [vmem:[%s0 + $0x94] sm:$0xf]
  %v55 = vld [vmem:[%s0 + $0x98] sm:$0xf]
  %v56 = vld [vmem:[%s0 + $0x9c] sm:$0xf]
  %v57 = vld [vmem:[%s0 + $0xa0] sm:$0xf]
  %v58 = vld [vmem:[%s0 + $0xa4] sm:$0xf]
  %v59 = vld [vmem:[%s0 + $0xa8] sm:$0xf]
  %v60 = vld [vmem:[%s0 + $0xac] sm:$0xf]
  %v61 = vld [vmem:[%s0 + $0xb0] sm:$0xf]
  %v62 = vld [vmem:[%s0 + $0xb4] sm:$0xf]
  %v63 = vld [vmem:[%s0 + $0xb8] sm:$0xf]
  %v64 = vld [vmem:[%s0 + $0xbc] sm:$0xf]
  %v65 = vld [vmem:[%s0 + $0xc0] sm:$0xf]
  %v66 = vld [vmem:[%s0 + $0xc4] sm:$0xf]
  %v67 = vld [vmem:[%s0 + $0xc8] sm:$0xf]
  %v68 = vld [vmem:[%s0 + $0xcc] sm:$0xf]
  %v69 = vld [vmem:[%s0 + $0xd0] sm:$0xf]
  %v70 = vld [vmem:[%s0 + $0xd4] sm:$0xf]
  %v71 = vld [vmem:[%s0 + $0xd8] sm:$0xf]
  %v72 = vld [vmem:[%s0 + $0xdc] sm:$0xf]
  %v73 = vld [vmem:[%s0 + $0xe0] sm:$0xf]
  %v74 = vld [vmem:[%s0 + $0xe4] sm:$0xf]
  %v75 = vld [vmem:[%s0 + $0xe8] sm:$0xf]
  %v76 = vld [vmem:[%s0 + $0xec] sm:$0xf]
  %v77 = vld [vmem:[%s0 + $0xf0] sm:$0xf]
  %v78 = vld [vmem:[%s0 + $0xf4] sm:$0xf]
  %v79 = vld [vmem:[%s0 + $0xf8] sm:$0xf]
  %v80 = vld [vmem:[%s0 + $0xfc] sm:$0xf]
  %v81 = vld [vmem:[%s0 + $0x100] sm:$0xf]
  %v82 = vld [vmem:[%s0 + $0x104] sm:$0xf]
  %v83 = vld [vmem:[%s0 + $0x108] sm:$0xf]
  %v84 = vld [vmem:[%s0 + $0x10c] sm:$0xf]
  %v85 = vld [vmem:[%s0 + $0x110] sm:$0xf]
  %v86 = vld [vmem:[%s0 + $0x114] sm:$0xf]
  %v87 = vld [vmem:[%s0 + $0x118] sm:$0xf]
  %v88 = vld [vmem:[%s0 + $0x11c] sm:$0xf]
  %v89 = vld [vmem:[%s0 + $0x120] sm:$0xf]
  %v90 = vld [vmem:[%s0 + $0x124] sm:$0xf]
  %v91 = vld [vmem:[%s0 + $0x128] sm:$0xf]
  %v92 = vld [vmem:[%s0 + $0x12c] sm:$0xf]
  %v93 = vld [vmem:[%s0 + $0x130] sm:$0xf]
  %v94 = vld [vmem:[%s0 + $0x134] sm:$0xf]
  %v95 = vld [vmem:[%s0 + $0x138] sm:$0xf]
  %v96 = vld [vmem:[%s0 + $0x13c] sm:$0xf]
  %v97 = vld [vmem:[%s0 + $0x140] sm:$0xf]
  %v98 = vld [vmem:[%s0 + $0x144] sm:$0xf]
  %v99 = vld [vmem:[%s0 + $0x148] sm:$0xf]
  %v100 = vld [vmem:[%s0 + $0x14c] sm:$0xf]
  %v101 = vld [vmem:[%s0 + $0x150] sm:$0xf]
  %v102 = vld [vmem:[%s0 + $0x154] sm:$0xf]
  %v103 = vld [vmem:[%s0 + $0x158] sm:$0xf]
  %v104 = vld [vmem:[%s0 + $0x15c] sm:$0xf]
  %v105 = vld [vmem:[%s0 + $0x160] sm:$0xf]
  %v106 = vld [vmem:[%s0 + $0x164] sm:$0xf]
  %v107 = vld [vmem:[%s0 + $0x168] sm:$0xf]
  %v108 = vld [vmem:[%s0 + $0x16c] sm:$0xf]
  %v109 = vld [vmem:[%s0 + $0x170] sm:$0xf]
  %v110 = vld [vmem:[%s0 + $0x174] sm:$0xf]
  %v111 = vld [vmem:[%s0 + $0x178] sm:$0xf]
  %v112 = vld [vmem:[%s0 + $0x17c] sm:$0xf]
  %v113 = vld [vmem:[%s0 + $0x180] sm:$0xf]
  %v114 = vld [vmem:[%s0 + $0x184] sm:$0xf]
  %v115 = vld [vmem:[%s0 + $0x188] sm:$0xf]
  %v116 = vld [vmem:[%s0 + $0x18c] sm:$0xf]
  %v117 = vld [vmem:[%s0 + $0x190] sm:$0xf]
  %v118 = vld [vmem:[%s0 + $0x194] sm:$0xf]
  %v119 = vld [vmem:[%s0 + $0x198] sm:$0xf]
  %v120 = vld [vmem:[%s0 + $0x19c] sm:$0xf]
  %v121 = vld [vmem:[%s0 + $0x1a0] sm:$0xf]
  %v122 = vld [vmem:[%s0 + $0x1a4] sm:$0xf]
  %v123 = vld [vmem:[%s0 + $0x1a8] sm:$0xf]
  %v124 = vld [vmem:[%s0 + $0x1ac] sm:$0xf]
  %v125 = vld [vmem:[%s0 + $0x1b0] sm:$0xf]
  %v126 = vld [vmem:[%s0 + $0x1b4] sm:$0xf]
  %v127 = vld [vmem:[%s0 + $0x1b8] sm:$0xf]
  %v128 = vld [vmem:[%s0 + $0x1bc] sm:$0xf]
  %v129 = vld [vmem:[%s0 + $0x1c0] sm:$0xf]
  %v130 = vld [vmem:[%s0 + $0x1c4] sm:$0xf]
  %v131 = vld [vmem:[%s0 + $0x1c8] sm:$0xf]
  %v132 = vld [vmem:[%s0 + $0x1cc] sm:$0xf]
  %v133 = vld [vmem:[%s0 + $0x1d0] sm:$0xf]
  %v134 = vld [vmem:[%s0 + $0x1d4] sm:$0xf]
  %v135 = vld [vmem:[%s0 + $0x1d8] sm:$0xf]
  %v136 = vld [vmem:[%s0 + $0x1dc] sm:$0xf]
  %v137 = vld [vmem:[%s0 + $0x1e0] sm:$0xf]
  %v138 = vld [vmem:[%s0 + $0x1e4] sm:$0xf]
  %v139 = vld [vmem:[%s0 + $0x1e8] sm:$0xf]
  %v140 = vld [vmem:[%s0 + $0x1ec] sm:$0xf]
  %v141 = vld [vmem:[%s0 + $0x1f0] sm:$0xf]
  %v142 = vld [vmem:[%s0 + $0x1f4] sm:$0xf]
  %v143 = vld [vmem:[%s0 + $0x1f8] sm:$0xf]
  %v144 = vld [vmem:[%s0 + $0x1fc] sm:$0xf]
  %v145 = vld [vmem:[%s1] sm:$0xf]
  %v146 = vld [vmem:[%s1 + $0x4] sm:$0xf]
  %v147 = vld [vmem:[%s1 + $0x8] sm:$0xf]
  %v148 = vld [vmem:[%s1 + $0xc] sm:$0xf]
  %v149 = vld [vmem:[%s1 + $0x10] sm:$0xf]
  %v150 = vld [vmem:[%s1 + $0x14] sm:$0xf]
  %v151 = vld [vmem:[%s1 + $0x18] sm:$0xf]
  %v152 = vld [vmem:[%s1 + $0x1c] sm:$0xf]
  %v153 = vld [vmem:[%s1 + $0x20] sm:$0xf]
  %v154 = vld [vmem:[%s1 + $0x24] sm:$0xf]
  %v155 = vld [vmem:[%s1 + $0x28] sm:$0xf]
  %v156 = vld [vmem:[%s1 + $0x2c] sm:$0xf]
  %v157 = vld [vmem:[%s1 + $0x30] sm:$0xf]
  %v158 = vld [vmem:[%s1 + $0x34] sm:$0xf]
  %v159 = vld [vmem:[%s1 + $0x38] sm:$0xf]
  %v160 = vld [vmem:[%s1 + $0x3c] sm:$0xf]
  %v161 = vld [vmem:[%s2] sm:$0x1]
  %v163 = vlaneseq
  %v164 = vshrl.u32 %v163, 7
  %v165 = vsub.s32 0, %v164
  %v166 = vrot.slane %v161, %v165
  %v296 = vunpack.c.l.b16 %v17
  %v297 = vunpack.c.l.b16 %v18
  %v298 = vunpack.c.l.b16 %v19
  %v299 = vunpack.c.l.b16 %v20
  %v300 = vunpack.c.l.b16 %v21
  %v301 = vunpack.c.l.b16 %v22
  %v302 = vunpack.c.l.b16 %v23
  %v303 = vunpack.c.l.b16 %v24
  %v304 = vunpack.c.l.b16 %v25
  %v305 = vunpack.c.l.b16 %v26
  %v306 = vunpack.c.l.b16 %v27
  %v307 = vunpack.c.l.b16 %v28
  %v308 = vunpack.c.l.b16 %v29
  %v309 = vunpack.c.l.b16 %v30
  %v310 = vunpack.c.l.b16 %v31
  %v311 = vunpack.c.l.b16 %v32
  %v312 = vunpack.c.l.b16 %v33
  %v313 = vunpack.c.l.b16 %v34
  %v314 = vunpack.c.l.b16 %v35
  %v315 = vunpack.c.l.b16 %v36
  %v316 = vunpack.c.l.b16 %v37
  %v317 = vunpack.c.l.b16 %v38
  %v318 = vunpack.c.l.b16 %v39
  %v319 = vunpack.c.l.b16 %v40
  %v320 = vunpack.c.l.b16 %v41
  %v321 = vunpack.c.l.b16 %v42
  %v322 = vunpack.c.l.b16 %v43
  %v323 = vunpack.c.l.b16 %v44
  %v324 = vunpack.c.l.b16 %v45
  %v325 = vunpack.c.l.b16 %v46
  %v326 = vunpack.c.l.b16 %v47
  %v327 = vunpack.c.l.b16 %v48
  %v328 = vunpack.c.l.b16 %v49
  %v329 = vunpack.c.l.b16 %v50
  %v330 = vunpack.c.l.b16 %v51
  %v331 = vunpack.c.l.b16 %v52
  %v332 = vunpack.c.l.b16 %v53
  %v333 = vunpack.c.l.b16 %v54
  %v334 = vunpack.c.l.b16 %v55
  %v335 = vunpack.c.l.b16 %v56
  %v336 = vunpack.c.l.b16 %v57
  %v337 = vunpack.c.l.b16 %v58
  %v338 = vunpack.c.l.b16 %v59
  %v339 = vunpack.c.l.b16 %v60
  %v340 = vunpack.c.l.b16 %v61
  %v341 = vunpack.c.l.b16 %v62
  %v342 = vunpack.c.l.b16 %v63
  %v343 = vunpack.c.l.b16 %v64
  %v344 = vunpack.c.l.b16 %v65
  %v345 = vunpack.c.l.b16 %v66
  %v346 = vunpack.c.l.b16 %v67
  %v347 = vunpack.c.l.b16 %v68
  %v348 = vunpack.c.l.b16 %v69
  %v349 = vunpack.c.l.b16 %v70
  %v350 = vunpack.c.l.b16 %v71
  %v351 = vunpack.c.l.b16 %v72
  %v352 = vunpack.c.l.b16 %v73
  %v353 = vunpack.c.l.b16 %v74
  %v354 = vunpack.c.l.b16 %v75
  %v355 = vunpack.c.l.b16 %v76
  %v356 = vunpack.c.l.b16 %v77
  %v357 = vunpack.c.l.b16 %v78
  %v358 = vunpack.c.l.b16 %v79
  %v359 = vunpack.c.l.b16 %v80
  %v360 = vunpack.c.l.b16 %v81
  %v361 = vunpack.c.l.b16 %v82
  %v362 = vunpack.c.l.b16 %v83
  %v363 = vunpack.c.l.b16 %v84
  %v364 = vunpack.c.l.b16 %v85
  %v365 = vunpack.c.l.b16 %v86
  %v366 = vunpack.c.l.b16 %v87
  %v367 = vunpack.c.l.b16 %v88
  %v368 = vunpack.c.l.b16 %v89
  %v369 = vunpack.c.l.b16 %v90
  %v370 = vunpack.c.l.b16 %v91
  %v371 = vunpack.c.l.b16 %v92
  %v372 = vunpack.c.l.b16 %v93
  %v373 = vunpack.c.l.b16 %v94
  %v374 = vunpack.c.l.b16 %v95
  %v375 = vunpack.c.l.b16 %v96
  %v376 = vunpack.c.l.b16 %v97
  %v377 = vunpack.c.l.b16 %v98
  %v378 = vunpack.c.l.b16 %v99
  %v379 = vunpack.c.l.b16 %v100
  %v380 = vunpack.c.l.b16 %v101
  %v381 = vunpack.c.l.b16 %v102
  %v382 = vunpack.c.l.b16 %v103
  %v383 = vunpack.c.l.b16 %v104
  %v384 = vunpack.c.l.b16 %v105
  %v385 = vunpack.c.l.b16 %v106
  %v386 = vunpack.c.l.b16 %v107
  %v387 = vunpack.c.l.b16 %v108
  %v388 = vunpack.c.l.b16 %v109
  %v389 = vunpack.c.l.b16 %v110
  %v390 = vunpack.c.l.b16 %v111
  %v391 = vunpack.c.l.b16 %v112
  %v392 = vunpack.c.l.b16 %v113
  %v393 = vunpack.c.l.b16 %v114
  %v394 = vunpack.c.l.b16 %v115
  %v395 = vunpack.c.l.b16 %v116
  %v396 = vunpack.c.l.b16 %v117
  %v397 = vunpack.c.l.b16 %v118
  %v398 = vunpack.c.l.b16 %v119
  %v399 = vunpack.c.l.b16 %v120
  %v400 = vunpack.c.l.b16 %v121
  %v401 = vunpack.c.l.b16 %v122
  %v402 = vunpack.c.l.b16 %v123
  %v403 = vunpack.c.l.b16 %v124
  %v404 = vunpack.c.l.b16 %v125
  %v405 = vunpack.c.l.b16 %v126
  %v406 = vunpack.c.l.b16 %v127
  %v407 = vunpack.c.l.b16 %v128
  %v408 = vunpack.c.l.b16 %v129
  %v409 = vunpack.c.l.b16 %v130
  %v410 = vunpack.c.l.b16 %v131
  %v411 = vunpack.c.l.b16 %v132
  %v412 = vunpack.c.l.b16 %v133
  %v413 = vunpack.c.l.b16 %v134
  %v414 = vunpack.c.l.b16 %v135
  %v415 = vunpack.c.l.b16 %v136
  %v416 = vunpack.c.l.b16 %v137
  %v417 = vunpack.c.l.b16 %v138
  %v418 = vunpack.c.l.b16 %v139
  %v419 = vunpack.c.l.b16 %v140
  %v420 = vunpack.c.l.b16 %v141
  %v421 = vunpack.c.l.b16 %v142
  %v422 = vunpack.c.l.b16 %v143
  %v423 = vunpack.c.l.b16 %v144
  %v424 = vpack.c.b16 %v297, %v296
  %v425 = vpack.c.b16 %v299, %v298
  %v426 = vpack.c.b16 %v301, %v300
  %v427 = vpack.c.b16 %v303, %v302
  %v428 = vpack.c.b16 %v305, %v304
  %v429 = vpack.c.b16 %v307, %v306
  %v430 = vpack.c.b16 %v309, %v308
  %v431 = vpack.c.b16 %v311, %v310
  %v432 = vpack.c.b16 %v313, %v312
  %v433 = vpack.c.b16 %v315, %v314
  %v434 = vpack.c.b16 %v317, %v316
  %v435 = vpack.c.b16 %v319, %v318
  %v436 = vpack.c.b16 %v321, %v320
  %v437 = vpack.c.b16 %v323, %v322
  %v438 = vpack.c.b16 %v325, %v324
  %v439 = vpack.c.b16 %v327, %v326
  %v440 = vpack.c.b16 %v329, %v328
  %v441 = vpack.c.b16 %v331, %v330
  %v442 = vpack.c.b16 %v333, %v332
  %v443 = vpack.c.b16 %v335, %v334
  %v444 = vpack.c.b16 %v337, %v336
  %v445 = vpack.c.b16 %v339, %v338
  %v446 = vpack.c.b16 %v341, %v340
  %v447 = vpack.c.b16 %v343, %v342
  %v448 = vpack.c.b16 %v345, %v344
  %v449 = vpack.c.b16 %v347, %v346
  %v450 = vpack.c.b16 %v349, %v348
  %v451 = vpack.c.b16 %v351, %v350
  %v452 = vpack.c.b16 %v353, %v352
  %v453 = vpack.c.b16 %v355, %v354
  %v454 = vpack.c.b16 %v357, %v356
  %v455 = vpack.c.b16 %v359, %v358
  %v456 = vpack.c.b16 %v361, %v360
  %v457 = vpack.c.b16 %v363, %v362
  %v458 = vpack.c.b16 %v365, %v364
  %v459 = vpack.c.b16 %v367, %v366
  %v460 = vpack.c.b16 %v369, %v368
  %v461 = vpack.c.b16 %v371, %v370
  %v462 = vpack.c.b16 %v373, %v372
  %v463 = vpack.c.b16 %v375, %v374
  %v464 = vpack.c.b16 %v377, %v376
  %v465 = vpack.c.b16 %v379, %v378
  %v466 = vpack.c.b16 %v381, %v380
  %v467 = vpack.c.b16 %v383, %v382
  %v468 = vpack.c.b16 %v385, %v384
  %v469 = vpack.c.b16 %v387, %v386
  %v470 = vpack.c.b16 %v389, %v388
  %v471 = vpack.c.b16 %v391, %v390
  %v472 = vpack.c.b16 %v393, %v392
  %v473 = vpack.c.b16 %v395, %v394
  %v474 = vpack.c.b16 %v397, %v396
  %v475 = vpack.c.b16 %v399, %v398
  %v476 = vpack.c.b16 %v401, %v400
  %v477 = vpack.c.b16 %v403, %v402
  %v478 = vpack.c.b16 %v405, %v404
  %v479 = vpack.c.b16 %v407, %v406
  %v480 = vpack.c.b16 %v409, %v408
  %v481 = vpack.c.b16 %v411, %v410
  %v482 = vpack.c.b16 %v413, %v412
  %v483 = vpack.c.b16 %v415, %v414
  %v484 = vpack.c.b16 %v417, %v416
  %v485 = vpack.c.b16 %v419, %v418
  %v486 = vpack.c.b16 %v421, %v420
  %v487 = vpack.c.b16 %v423, %v422
  %v568 = vunpack.c.l.b16 %v145
  %v569 = vunpack.c.l.b16 %v146
  %v570 = vunpack.c.l.b16 %v147
  %v571 = vunpack.c.l.b16 %v148
  %v572 = vunpack.c.l.b16 %v149
  %v573 = vunpack.c.l.b16 %v150
  %v574 = vunpack.c.l.b16 %v151
  %v575 = vunpack.c.l.b16 %v152
  %v576 = vunpack.c.l.b16 %v153
  %v577 = vunpack.c.l.b16 %v154
  %v578 = vunpack.c.l.b16 %v155
  %v579 = vunpack.c.l.b16 %v156
  %v580 = vunpack.c.l.b16 %v157
  %v581 = vunpack.c.l.b16 %v158
  %v582 = vunpack.c.l.b16 %v159
  %v583 = vunpack.c.l.b16 %v160
  %v584 = vpack.c.b16 %v569, %v568
  %v585 = vpack.c.b16 %v571, %v570
  %v586 = vpack.c.b16 %v573, %v572
  %v587 = vpack.c.b16 %v575, %v574
  %v588 = vpack.c.b16 %v577, %v576
  %v589 = vpack.c.b16 %v579, %v578
  %v590 = vpack.c.b16 %v581, %v580
  %v591 = vpack.c.b16 %v583, %v582
  %600 = vmatprep.subr.bf16.mxu0 0
  %601 = vmatpush1.bf16.msra.mxu0 %v584
  %602 = vmatprep.subr.bf16.mxu0 0
  %603 = vmatpush1.bf16.msra.mxu0 %v585
  %604 = vmatprep.subr.bf16.mxu0 0
  %605 = vmatpush1.bf16.msra.mxu0 %v586
  %606 = vmatprep.subr.bf16.mxu0 0
  %607 = vmatpush1.bf16.msra.mxu0 %v587
  %608 = vmatprep.subr.bf16.mxu0 0
  %609 = vmatpush1.bf16.msra.mxu0 %v588
  %610 = vmatprep.subr.bf16.mxu0 0
  %611 = vmatpush1.bf16.msra.mxu0 %v589
  %612 = vmatprep.subr.bf16.mxu0 0
  %613 = vmatpush1.bf16.msra.mxu0 %v590
  %614 = vmatprep.subr.bf16.mxu0 0
  %615 = vmatpush1.bf16.msra.mxu0 %v591
  %616 = vmatprep.subr.bf16.mxu0 0
  %617 = vmatpush1.bf16.msra.mxu0 0
  %618 = vmatprep.subr.bf16.mxu0 0
  %619 = vmatpush1.bf16.msra.mxu0 0
  %620 = vmatprep.subr.bf16.mxu0 0
  %621 = vmatpush1.bf16.msra.mxu0 0
  %622 = vmatprep.subr.bf16.mxu0 0
  %623 = vmatpush1.bf16.msra.mxu0 0
  %624 = vmatprep.subr.bf16.mxu0 0
  %625 = vmatpush1.bf16.msra.mxu0 0
  %626 = vmatprep.subr.bf16.mxu0 0
  %627 = vmatpush1.bf16.msra.mxu0 0
  %628 = vmatprep.subr.bf16.mxu0 0
  %629 = vmatpush1.bf16.msra.mxu0 0
  %630 = vmatprep.subr.bf16.mxu0 0
  %631 = vmatpush1.bf16.msra.mxu0 0
  %632 = vmatprep.mubr.bf16.mxu0 0
  %633 = vmatmul.mubr.bf16.gmra.mrb[0].mxu0 %v424
  %v634 = vpop.f32.mrb[0].mxu0
  %v635 = vadd.f32 %v166, %v634
  %v636 = vpop.f32.mrb[0].mxu0
  %v637 = vpop.f32.mrb[0].mxu0
  %v638 = vadd.f32 %v166, %v637
  %v639 = vpop.f32.mrb[0].mxu0
  %640 = vmatprep.mubr.bf16.mxu0 0
  %641 = vmatmul.mubr.bf16.gmra.mrb[0].mxu0 %v425
  %v642 = vpop.f32.mrb[0].mxu0
  %v643 = vadd.f32 %v166, %v642
  %v644 = vpop.f32.mrb[0].mxu0
  %v645 = vpop.f32.mrb[0].mxu0
  %v646 = vadd.f32 %v166, %v645
  %v647 = vpop.f32.mrb[0].mxu0
  %648 = vmatprep.mubr.bf16.mxu0 0
  %649 = vmatmul.mubr.bf16.gmra.mrb[0].mxu0 %v426
  %v650 = vpop.f32.mrb[0].mxu0
  %v651 = vadd.f32 %v166, %v650
  %v652 = vpop.f32.mrb[0].mxu0
  %v653 = vpop.f32.mrb[0].mxu0
  %v654 = vadd.f32 %v166, %v653
  %v655 = vpop.f32.mrb[0].mxu0
  %656 = vmatprep.mubr.bf16.mxu0 0
  %657 = vmatmul.mubr.bf16.gmra.mrb[0].mxu0 %v427
  %v658 = vpop.f32.mrb[0].mxu0
  %v659 = vadd.f32 %v166, %v658
  %v660 = vpop.f32.mrb[0].mxu0
  %v661 = vpop.f32.mrb[0].mxu0
  %v662 = vadd.f32 %v166, %v661
  %v663 = vpop.f32.mrb[0].mxu0
  %664 = vmatprep.mubr.bf16.mxu0 0
  %665 = vmatmul.mubr.bf16.gmra.mrb[0].mxu0 %v428
  %v666 = vpop.f32.mrb[0].mxu0
  %v667 = vadd.f32 %v166, %v666
  %v668 = vpop.f32.mrb[0].mxu0
  %v669 = vpop.f32.mrb[0].mxu0
  %v670 = vadd.f32 %v166, %v669
  %v671 = vpop.f32.mrb[0].mxu0
  %672 = vmatprep.mubr.bf16.mxu0 0
  %673 = vmatmul.mubr.bf16.gmra.mrb[0].mxu0 %v429
  %v674 = vpop.f32.mrb[0].mxu0
  %v675 = vadd.f32 %v166, %v674
  %v676 = vpop.f32.mrb[0].mxu0
  %v677 = vpop.f32.mrb[0].mxu0
  %v678 = vadd.f32 %v166, %v677
  %v679 = vpop.f32.mrb[0].mxu0
  %680 = vmatprep.mubr.bf16.mxu0 0
  %681 = vmatmul.mubr.bf16.gmra.mrb[0].mxu0 %v430
  %v682 = vpop.f32.mrb[0].mxu0
  %v683 = vadd.f32 %v166, %v682
  %v684 = vpop.f32.mrb[0].mxu0
  %v685 = vpop.f32.mrb[0].mxu0
  %v686 = vadd.f32 %v166, %v685
  %v687 = vpop.f32.mrb[0].mxu0
  %688 = vmatprep.mubr.bf16.mxu0 0
  %689 = vmatmul.mubr.bf16.gmra.mrb[0].mxu0 %v431
  %v690 = vpop.f32.mrb[0].mxu0
  %v691 = vadd.f32 %v166, %v690
  %v692 = vpop.f32.mrb[0].mxu0
  %v693 = vpop.f32.mrb[0].mxu0
  %v694 = vadd.f32 %v166, %v693
  %v695 = vpop.f32.mrb[0].mxu0
  %696 = vmatprep.mubr.bf16.mxu0 0
  %697 = vmatmul.mubr.bf16.gmra.mrb[0].mxu0 %v432
  %v698 = vpop.f32.mrb[0].mxu0
  %v699 = vadd.f32 %v166, %v698
  %v700 = vpop.f32.mrb[0].mxu0
  %v701 = vpop.f32.mrb[0].mxu0
  %v702 = vadd.f32 %v166, %v701
  %v703 = vpop.f32.mrb[0].mxu0
  %704 = vmatprep.mubr.bf16.mxu0 0
  %705 = vmatmul.mubr.bf16.gmra.mrb[0].mxu0 %v433
  %v706 = vpop.f32.mrb[0].mxu0
  %v707 = vadd.f32 %v166, %v706
  %v708 = vpop.f32.mrb[0].mxu0
  %v709 = vpop.f32.mrb[0].mxu0
  %v710 = vadd.f32 %v166, %v709
  %v711 = vpop.f32.mrb[0].mxu0
  %712 = vmatprep.mubr.bf16.mxu0 0
  %713 = vmatmul.mubr.bf16.gmra.mrb[0].mxu0 %v434
  %v714 = vpop.f32.mrb[0].mxu0
  %v715 = vadd.f32 %v166, %v714
  %v716 = vpop.f32.mrb[0].mxu0
  %v717 = vpop.f32.mrb[0].mxu0
  %v718 = vadd.f32 %v166, %v717
  %v719 = vpop.f32.mrb[0].mxu0
  %720 = vmatprep.mubr.bf16.mxu0 0
  %721 = vmatmul.mubr.bf16.gmra.mrb[0].mxu0 %v435
  %v722 = vpop.f32.mrb[0].mxu0
  %v723 = vadd.f32 %v166, %v722
  %v724 = vpop.f32.mrb[0].mxu0
  %v725 = vpop.f32.mrb[0].mxu0
  %v726 = vadd.f32 %v166, %v725
  %v727 = vpop.f32.mrb[0].mxu0
  %728 = vmatprep.mubr.bf16.mxu0 0
  %729 = vmatmul.mubr.bf16.gmra.mrb[0].mxu0 %v436
  %v730 = vpop.f32.mrb[0].mxu0
  %v731 = vadd.f32 %v166, %v730
  %v732 = vpop.f32.mrb[0].mxu0
  %v733 = vpop.f32.mrb[0].mxu0
  %v734 = vadd.f32 %v166, %v733
  %v735 = vpop.f32.mrb[0].mxu0
  %736 = vmatprep.mubr.bf16.mxu0 0
  %737 = vmatmul.mubr.bf16.gmra.mrb[0].mxu0 %v437
  %v738 = vpop.f32.mrb[0].mxu0
  %v739 = vadd.f32 %v166, %v738
  %v740 = vpop.f32.mrb[0].mxu0
  %v741 = vpop.f32.mrb[0].mxu0
  %v742 = vadd.f32 %v166, %v741
  %v743 = vpop.f32.mrb[0].mxu0
  %744 = vmatprep.mubr.bf16.mxu0 0
  %745 = vmatmul.mubr.bf16.gmra.mrb[0].mxu0 %v438
  %v746 = vpop.f32.mrb[0].mxu0
  %v747 = vadd.f32 %v166, %v746
  %v748 = vpop.f32.mrb[0].mxu0
  %v749 = vpop.f32.mrb[0].mxu0
  %v750 = vadd.f32 %v166, %v749
  %v751 = vpop.f32.mrb[0].mxu0
  %752 = vmatprep.mubr.bf16.mxu0 0
  %753 = vmatmul.mubr.bf16.gmra.mrb[0].mxu0 %v439
  %v754 = vpop.f32.mrb[0].mxu0
  %v755 = vadd.f32 %v166, %v754
  %v756 = vpop.f32.mrb[0].mxu0
  %v757 = vpop.f32.mrb[0].mxu0
  %v758 = vadd.f32 %v166, %v757
  %v759 = vpop.f32.mrb[0].mxu0
  %760 = vmatprep.mubr.bf16.mxu0 0
  %761 = vmatmul.mubr.bf16.gmra.mrb[0].mxu0 %v440
  %v762 = vpop.f32.mrb[0].mxu0
  %v763 = vadd.f32 %v166, %v762
  %v764 = vpop.f32.mrb[0].mxu0
  %v765 = vpop.f32.mrb[0].mxu0
  %v766 = vadd.f32 %v166, %v765
  %v767 = vpop.f32.mrb[0].mxu0
  %768 = vmatprep.mubr.bf16.mxu0 0
  %769 = vmatmul.mubr.bf16.gmra.mrb[0].mxu0 %v441
  %v770 = vpop.f32.mrb[0].mxu0
  %v771 = vadd.f32 %v166, %v770
  %v772 = vpop.f32.mrb[0].mxu0
  %v773 = vpop.f32.mrb[0].mxu0
  %v774 = vadd.f32 %v166, %v773
  %v775 = vpop.f32.mrb[0].mxu0
  %776 = vmatprep.mubr.bf16.mxu0 0
  %777 = vmatmul.mubr.bf16.gmra.mrb[0].mxu0 %v442
  %v778 = vpop.f32.mrb[0].mxu0
  %v779 = vadd.f32 %v166, %v778
  %v780 = vpop.f32.mrb[0].mxu0
  %v781 = vpop.f32.mrb[0].mxu0
  %v782 = vadd.f32 %v166, %v781
  %v783 = vpop.f32.mrb[0].mxu0
  %784 = vmatprep.mubr.bf16.mxu0 0
  %785 = vmatmul.mubr.bf16.gmra.mrb[0].mxu0 %v443
  %v786 = vpop.f32.mrb[0].mxu0
  %v787 = vadd.f32 %v166, %v786
  %v788 = vpop.f32.mrb[0].mxu0
  %v789 = vpop.f32.mrb[0].mxu0
  %v790 = vadd.f32 %v166, %v789
  %v791 = vpop.f32.mrb[0].mxu0
  %792 = vmatprep.mubr.bf16.mxu0 0
  %793 = vmatmul.mubr.bf16.gmra.mrb[0].mxu0 %v444
  %v794 = vpop.f32.mrb[0].mxu0
  %v795 = vadd.f32 %v166, %v794
  %v796 = vpop.f32.mrb[0].mxu0
  %v797 = vpop.f32.mrb[0].mxu0
  %v798 = vadd.f32 %v166, %v797
  %v799 = vpop.f32.mrb[0].mxu0
  %800 = vmatprep.mubr.bf16.mxu0 0
  %801 = vmatmul.mubr.bf16.gmra.mrb[0].mxu0 %v445
  %v802 = vpop.f32.mrb[0].mxu0
  %v803 = vadd.f32 %v166, %v802
  %v804 = vpop.f32.mrb[0].mxu0
  %v805 = vpop.f32.mrb[0].mxu0
  %v806 = vadd.f32 %v166, %v805
  %v807 = vpop.f32.mrb[0].mxu0
  %808 = vmatprep.mubr.bf16.mxu0 0
  %809 = vmatmul.mubr.bf16.gmra.mrb[0].mxu0 %v446
  %v810 = vpop.f32.mrb[0].mxu0
  %v811 = vadd.f32 %v166, %v810
  %v812 = vpop.f32.mrb[0].mxu0
  %v813 = vpop.f32.mrb[0].mxu0
  %v814 = vadd.f32 %v166, %v813
  %v815 = vpop.f32.mrb[0].mxu0
  %816 = vmatprep.mubr.bf16.mxu0 0
  %817 = vmatmul.mubr.bf16.gmra.mrb[0].mxu0 %v447
  %v818 = vpop.f32.mrb[0].mxu0
  %v819 = vadd.f32 %v166, %v818
  %v820 = vpop.f32.mrb[0].mxu0
  %v821 = vpop.f32.mrb[0].mxu0
  %v822 = vadd.f32 %v166, %v821
  %v823 = vpop.f32.mrb[0].mxu0
  %824 = vmatprep.mubr.bf16.mxu0 0
  %825 = vmatmul.mubr.bf16.gmra.mrb[0].mxu0 %v448
  %v826 = vpop.f32.mrb[0].mxu0
  %v827 = vadd.f32 %v166, %v826
  %v828 = vpop.f32.mrb[0].mxu0
  %v829 = vpop.f32.mrb[0].mxu0
  %v830 = vadd.f32 %v166, %v829
  %v831 = vpop.f32.mrb[0].mxu0
  %832 = vmatprep.mubr.bf16.mxu0 0
  %833 = vmatmul.mubr.bf16.gmra.mrb[0].mxu0 %v449
  %v834 = vpop.f32.mrb[0].mxu0
  %v835 = vadd.f32 %v166, %v834
  %v836 = vpop.f32.mrb[0].mxu0
  %v837 = vpop.f32.mrb[0].mxu0
  %v838 = vadd.f32 %v166, %v837
  %v839 = vpop.f32.mrb[0].mxu0
  %840 = vmatprep.mubr.bf16.mxu0 0
  %841 = vmatmul.mubr.bf16.gmra.mrb[0].mxu0 %v450
  %v842 = vpop.f32.mrb[0].mxu0
  %v843 = vadd.f32 %v166, %v842
  %v844 = vpop.f32.mrb[0].mxu0
  %v845 = vpop.f32.mrb[0].mxu0
  %v846 = vadd.f32 %v166, %v845
  %v847 = vpop.f32.mrb[0].mxu0
  %848 = vmatprep.mubr.bf16.mxu0 0
  %849 = vmatmul.mubr.bf16.gmra.mrb[0].mxu0 %v451
  %v850 = vpop.f32.mrb[0].mxu0
  %v851 = vadd.f32 %v166, %v850
  %v852 = vpop.f32.mrb[0].mxu0
  %v853 = vpop.f32.mrb[0].mxu0
  %v854 = vadd.f32 %v166, %v853
  %v855 = vpop.f32.mrb[0].mxu0
  %856 = vmatprep.mubr.bf16.mxu0 0
  %857 = vmatmul.mubr.bf16.gmra.mrb[0].mxu0 %v452
  %v858 = vpop.f32.mrb[0].mxu0
  %v859 = vadd.f32 %v166, %v858
  %v860 = vpop.f32.mrb[0].mxu0
  %v861 = vpop.f32.mrb[0].mxu0
  %v862 = vadd.f32 %v166, %v861
  %v863 = vpop.f32.mrb[0].mxu0
  %864 = vmatprep.mubr.bf16.mxu0 0
  %865 = vmatmul.mubr.bf16.gmra.mrb[0].mxu0 %v453
  %v866 = vpop.f32.mrb[0].mxu0
  %v867 = vadd.f32 %v166, %v866
  %v868 = vpop.f32.mrb[0].mxu0
  %v869 = vpop.f32.mrb[0].mxu0
  %v870 = vadd.f32 %v166, %v869
  %v871 = vpop.f32.mrb[0].mxu0
  %872 = vmatprep.mubr.bf16.mxu0 0
  %873 = vmatmul.mubr.bf16.gmra.mrb[0].mxu0 %v454
  %v874 = vpop.f32.mrb[0].mxu0
  %v875 = vadd.f32 %v166, %v874
  %v876 = vpop.f32.mrb[0].mxu0
  %v877 = vpop.f32.mrb[0].mxu0
  %v878 = vadd.f32 %v166, %v877
  %v879 = vpop.f32.mrb[0].mxu0
  %880 = vmatprep.mubr.bf16.mxu0 0
  %881 = vmatmul.mubr.bf16.gmra.mrb[0].mxu0 %v455
  %v882 = vpop.f32.mrb[0].mxu0
  %v883 = vadd.f32 %v166, %v882
  %v884 = vpop.f32.mrb[0].mxu0
  %v885 = vpop.f32.mrb[0].mxu0
  %v886 = vadd.f32 %v166, %v885
  %v887 = vpop.f32.mrb[0].mxu0
  %888 = vmatprep.mubr.bf16.mxu0 0
  %889 = vmatmul.mubr.bf16.gmra.mrb[0].mxu0 %v456
  %v890 = vpop.f32.mrb[0].mxu0
  %v891 = vadd.f32 %v166, %v890
  %v892 = vpop.f32.mrb[0].mxu0
  %v893 = vpop.f32.mrb[0].mxu0
  %v894 = vadd.f32 %v166, %v893
  %v895 = vpop.f32.mrb[0].mxu0
  %896 = vmatprep.mubr.bf16.mxu0 0
  %897 = vmatmul.mubr.bf16.gmra.mrb[0].mxu0 %v457
  %v898 = vpop.f32.mrb[0].mxu0
  %v899 = vadd.f32 %v166, %v898
  %v900 = vpop.f32.mrb[0].mxu0
  %v901 = vpop.f32.mrb[0].mxu0
  %v902 = vadd.f32 %v166, %v901
  %v903 = vpop.f32.mrb[0].mxu0
  %904 = vmatprep.mubr.bf16.mxu0 0
  %905 = vmatmul.mubr.bf16.gmra.mrb[0].mxu0 %v458
  %v906 = vpop.f32.mrb[0].mxu0
  %v907 = vadd.f32 %v166, %v906
  %v908 = vpop.f32.mrb[0].mxu0
  %v909 = vpop.f32.mrb[0].mxu0
  %v910 = vadd.f32 %v166, %v909
  %v911 = vpop.f32.mrb[0].mxu0
  %912 = vmatprep.mubr.bf16.mxu0 0
  %913 = vmatmul.mubr.bf16.gmra.mrb[0].mxu0 %v459
  %v914 = vpop.f32.mrb[0].mxu0
  %v915 = vadd.f32 %v166, %v914
  %v916 = vpop.f32.mrb[0].mxu0
  %v917 = vpop.f32.mrb[0].mxu0
  %v918 = vadd.f32 %v166, %v917
  %v919 = vpop.f32.mrb[0].mxu0
  %920 = vmatprep.mubr.bf16.mxu0 0
  %921 = vmatmul.mubr.bf16.gmra.mrb[0].mxu0 %v460
  %v922 = vpop.f32.mrb[0].mxu0
  %v923 = vadd.f32 %v166, %v922
  %v924 = vpop.f32.mrb[0].mxu0
  %v925 = vpop.f32.mrb[0].mxu0
  %v926 = vadd.f32 %v166, %v925
  %v927 = vpop.f32.mrb[0].mxu0
  %928 = vmatprep.mubr.bf16.mxu0 0
  %929 = vmatmul.mubr.bf16.gmra.mrb[0].mxu0 %v461
  %v930 = vpop.f32.mrb[0].mxu0
  %v931 = vadd.f32 %v166, %v930
  %v932 = vpop.f32.mrb[0].mxu0
  %v933 = vpop.f32.mrb[0].mxu0
  %v934 = vadd.f32 %v166, %v933
  %v935 = vpop.f32.mrb[0].mxu0
  %936 = vmatprep.mubr.bf16.mxu0 0
  %937 = vmatmul.mubr.bf16.gmra.mrb[0].mxu0 %v462
  %v938 = vpop.f32.mrb[0].mxu0
  %v939 = vadd.f32 %v166, %v938
  %v940 = vpop.f32.mrb[0].mxu0
  %v941 = vpop.f32.mrb[0].mxu0
  %v942 = vadd.f32 %v166, %v941
  %v943 = vpop.f32.mrb[0].mxu0
  %944 = vmatprep.mubr.bf16.mxu0 0
  %945 = vmatmul.mubr.bf16.gmra.mrb[0].mxu0 %v463
  %v946 = vpop.f32.mrb[0].mxu0
  %v947 = vadd.f32 %v166, %v946
  %v948 = vpop.f32.mrb[0].mxu0
  %v949 = vpop.f32.mrb[0].mxu0
  %v950 = vadd.f32 %v166, %v949
  %v951 = vpop.f32.mrb[0].mxu0
  %952 = vmatprep.mubr.bf16.mxu0 0
  %953 = vmatmul.mubr.bf16.gmra.mrb[0].mxu0 %v464
  %v954 = vpop.f32.mrb[0].mxu0
  %v955 = vadd.f32 %v166, %v954
  %v956 = vpop.f32.mrb[0].mxu0
  %v957 = vpop.f32.mrb[0].mxu0
  %v958 = vadd.f32 %v166, %v957
  %v959 = vpop.f32.mrb[0].mxu0
  %960 = vmatprep.mubr.bf16.mxu0 0
  %961 = vmatmul.mubr.bf16.gmra.mrb[0].mxu0 %v465
  %v962 = vpop.f32.mrb[0].mxu0
  %v963 = vadd.f32 %v166, %v962
  %v964 = vpop.f32.mrb[0].mxu0
  %v965 = vpop.f32.mrb[0].mxu0
  %v966 = vadd.f32 %v166, %v965
  %v967 = vpop.f32.mrb[0].mxu0
  %968 = vmatprep.mubr.bf16.mxu0 0
  %969 = vmatmul.mubr.bf16.gmra.mrb[0].mxu0 %v466
  %v970 = vpop.f32.mrb[0].mxu0
  %v971 = vadd.f32 %v166, %v970
  %v972 = vpop.f32.mrb[0].mxu0
  %v973 = vpop.f32.mrb[0].mxu0
  %v974 = vadd.f32 %v166, %v973
  %v975 = vpop.f32.mrb[0].mxu0
  %976 = vmatprep.mubr.bf16.mxu0 0
  %977 = vmatmul.mubr.bf16.gmra.mrb[0].mxu0 %v467
  %v978 = vpop.f32.mrb[0].mxu0
  %v979 = vadd.f32 %v166, %v978
  %v980 = vpop.f32.mrb[0].mxu0
  %v981 = vpop.f32.mrb[0].mxu0
  %v982 = vadd.f32 %v166, %v981
  %v983 = vpop.f32.mrb[0].mxu0
  %984 = vmatprep.mubr.bf16.mxu0 0
  %985 = vmatmul.mubr.bf16.gmra.mrb[0].mxu0 %v468
  %v986 = vpop.f32.mrb[0].mxu0
  %v987 = vadd.f32 %v166, %v986
  %v988 = vpop.f32.mrb[0].mxu0
  %v989 = vpop.f32.mrb[0].mxu0
  %v990 = vadd.f32 %v166, %v989
  %v991 = vpop.f32.mrb[0].mxu0
  %992 = vmatprep.mubr.bf16.mxu0 0
  %993 = vmatmul.mubr.bf16.gmra.mrb[0].mxu0 %v469
  %v994 = vpop.f32.mrb[0].mxu0
  %v995 = vadd.f32 %v166, %v994
  %v996 = vpop.f32.mrb[0].mxu0
  %v997 = vpop.f32.mrb[0].mxu0
  %v998 = vadd.f32 %v166, %v997
  %v999 = vpop.f32.mrb[0].mxu0
  %1000 = vmatprep.mubr.bf16.mxu0 0
  %1001 = vmatmul.mubr.bf16.gmra.mrb[0].mxu0 %v470
  %v1002 = vpop.f32.mrb[0].mxu0
  %v1003 = vadd.f32 %v166, %v1002
  %v1004 = vpop.f32.mrb[0].mxu0
  %v1005 = vpop.f32.mrb[0].mxu0
  %v1006 = vadd.f32 %v166, %v1005
  %v1007 = vpop.f32.mrb[0].mxu0
  %1008 = vmatprep.mubr.bf16.mxu0 0
  %1009 = vmatmul.mubr.bf16.gmra.mrb[0].mxu0 %v471
  %v1010 = vpop.f32.mrb[0].mxu0
  %v1011 = vadd.f32 %v166, %v1010
  %v1012 = vpop.f32.mrb[0].mxu0
  %v1013 = vpop.f32.mrb[0].mxu0
  %v1014 = vadd.f32 %v166, %v1013
  %v1015 = vpop.f32.mrb[0].mxu0
  %1016 = vmatprep.mubr.bf16.mxu0 0
  %1017 = vmatmul.mubr.bf16.gmra.mrb[0].mxu0 %v472
  %v1018 = vpop.f32.mrb[0].mxu0
  %v1019 = vadd.f32 %v166, %v1018
  %v1020 = vpop.f32.mrb[0].mxu0
  %v1021 = vpop.f32.mrb[0].mxu0
  %v1022 = vadd.f32 %v166, %v1021
  %v1023 = vpop.f32.mrb[0].mxu0
  %1024 = vmatprep.mubr.bf16.mxu0 0
  %1025 = vmatmul.mubr.bf16.gmra.mrb[0].mxu0 %v473
  %v1026 = vpop.f32.mrb[0].mxu0
  %v1027 = vadd.f32 %v166, %v1026
  %v1028 = vpop.f32.mrb[0].mxu0
  %v1029 = vpop.f32.mrb[0].mxu0
  %v1030 = vadd.f32 %v166, %v1029
  %v1031 = vpop.f32.mrb[0].mxu0
  %1032 = vmatprep.mubr.bf16.mxu0 0
  %1033 = vmatmul.mubr.bf16.gmra.mrb[0].mxu0 %v474
  %v1034 = vpop.f32.mrb[0].mxu0
  %v1035 = vadd.f32 %v166, %v1034
  %v1036 = vpop.f32.mrb[0].mxu0
  %v1037 = vpop.f32.mrb[0].mxu0
  %v1038 = vadd.f32 %v166, %v1037
  %v1039 = vpop.f32.mrb[0].mxu0
  %1040 = vmatprep.mubr.bf16.mxu0 0
  %1041 = vmatmul.mubr.bf16.gmra.mrb[0].mxu0 %v475
  %v1042 = vpop.f32.mrb[0].mxu0
  %v1043 = vadd.f32 %v166, %v1042
  %v1044 = vpop.f32.mrb[0].mxu0
  %v1045 = vpop.f32.mrb[0].mxu0
  %v1046 = vadd.f32 %v166, %v1045
  %v1047 = vpop.f32.mrb[0].mxu0
  %1048 = vmatprep.mubr.bf16.mxu0 0
  %1049 = vmatmul.mubr.bf16.gmra.mrb[0].mxu0 %v476
  %v1050 = vpop.f32.mrb[0].mxu0
  %v1051 = vadd.f32 %v166, %v1050
  %v1052 = vpop.f32.mrb[0].mxu0
  %v1053 = vpop.f32.mrb[0].mxu0
  %v1054 = vadd.f32 %v166, %v1053
  %v1055 = vpop.f32.mrb[0].mxu0
  %1056 = vmatprep.mubr.bf16.mxu0 0
  %1057 = vmatmul.mubr.bf16.gmra.mrb[0].mxu0 %v477
  %v1058 = vpop.f32.mrb[0].mxu0
  %v1059 = vadd.f32 %v166, %v1058
  %v1060 = vpop.f32.mrb[0].mxu0
  %v1061 = vpop.f32.mrb[0].mxu0
  %v1062 = vadd.f32 %v166, %v1061
  %v1063 = vpop.f32.mrb[0].mxu0
  %1064 = vmatprep.mubr.bf16.mxu0 0
  %1065 = vmatmul.mubr.bf16.gmra.mrb[0].mxu0 %v478
  %v1066 = vpop.f32.mrb[0].mxu0
  %v1067 = vadd.f32 %v166, %v1066
  %v1068 = vpop.f32.mrb[0].mxu0
  %v1069 = vpop.f32.mrb[0].mxu0
  %v1070 = vadd.f32 %v166, %v1069
  %v1071 = vpop.f32.mrb[0].mxu0
  %1072 = vmatprep.mubr.bf16.mxu0 0
  %1073 = vmatmul.mubr.bf16.gmra.mrb[0].mxu0 %v479
  %v1074 = vpop.f32.mrb[0].mxu0
  %v1075 = vadd.f32 %v166, %v1074
  %v1076 = vpop.f32.mrb[0].mxu0
  %v1077 = vpop.f32.mrb[0].mxu0
  %v1078 = vadd.f32 %v166, %v1077
  %v1079 = vpop.f32.mrb[0].mxu0
  %1080 = vmatprep.mubr.bf16.mxu0 0
  %1081 = vmatmul.mubr.bf16.gmra.mrb[0].mxu0 %v480
  %v1082 = vpop.f32.mrb[0].mxu0
  %v1083 = vadd.f32 %v166, %v1082
  %v1084 = vpop.f32.mrb[0].mxu0
  %v1085 = vpop.f32.mrb[0].mxu0
  %v1086 = vadd.f32 %v166, %v1085
  %v1087 = vpop.f32.mrb[0].mxu0
  %1088 = vmatprep.mubr.bf16.mxu0 0
  %1089 = vmatmul.mubr.bf16.gmra.mrb[0].mxu0 %v481
  %v1090 = vpop.f32.mrb[0].mxu0
  %v1091 = vadd.f32 %v166, %v1090
  %v1092 = vpop.f32.mrb[0].mxu0
  %v1093 = vpop.f32.mrb[0].mxu0
  %v1094 = vadd.f32 %v166, %v1093
  %v1095 = vpop.f32.mrb[0].mxu0
  %1096 = vmatprep.mubr.bf16.mxu0 0
  %1097 = vmatmul.mubr.bf16.gmra.mrb[0].mxu0 %v482
  %v1098 = vpop.f32.mrb[0].mxu0
  %v1099 = vadd.f32 %v166, %v1098
  %v1100 = vpop.f32.mrb[0].mxu0
  %v1101 = vpop.f32.mrb[0].mxu0
  %v1102 = vadd.f32 %v166, %v1101
  %v1103 = vpop.f32.mrb[0].mxu0
  %1104 = vmatprep.mubr.bf16.mxu0 0
  %1105 = vmatmul.mubr.bf16.gmra.mrb[0].mxu0 %v483
  %v1106 = vpop.f32.mrb[0].mxu0
  %v1107 = vadd.f32 %v166, %v1106
  %v1108 = vpop.f32.mrb[0].mxu0
  %v1109 = vpop.f32.mrb[0].mxu0
  %v1110 = vadd.f32 %v166, %v1109
  %v1111 = vpop.f32.mrb[0].mxu0
  %1112 = vmatprep.mubr.bf16.mxu0 0
  %1113 = vmatmul.mubr.bf16.gmra.mrb[0].mxu0 %v484
  %v1114 = vpop.f32.mrb[0].mxu0
  %v1115 = vadd.f32 %v166, %v1114
  %v1116 = vpop.f32.mrb[0].mxu0
  %v1117 = vpop.f32.mrb[0].mxu0
  %v1118 = vadd.f32 %v166, %v1117
  %v1119 = vpop.f32.mrb[0].mxu0
  %1120 = vmatprep.mubr.bf16.mxu0 0
  %1121 = vmatmul.mubr.bf16.gmra.mrb[0].mxu0 %v485
  %v1122 = vpop.f32.mrb[0].mxu0
  %v1123 = vadd.f32 %v166, %v1122
  %v1124 = vpop.f32.mrb[0].mxu0
  %v1125 = vpop.f32.mrb[0].mxu0
  %v1126 = vadd.f32 %v166, %v1125
  %v1127 = vpop.f32.mrb[0].mxu0
  %1128 = vmatprep.mubr.bf16.mxu0 0
  %1129 = vmatmul.mubr.bf16.gmra.mrb[0].mxu0 %v486
  %v1130 = vpop.f32.mrb[0].mxu0
  %v1131 = vadd.f32 %v166, %v1130
  %v1132 = vpop.f32.mrb[0].mxu0
  %v1133 = vpop.f32.mrb[0].mxu0
  %v1134 = vadd.f32 %v166, %v1133
  %v1135 = vpop.f32.mrb[0].mxu0
  %1136 = vmatprep.mubr.bf16.mxu0 0
  %1137 = vmatmul.mubr.bf16.gmra.mrb[0].mxu0 %v487
  %v1138 = vpop.f32.mrb[0].mxu0
  %v1139 = vadd.f32 %v166, %v1138
  %v1140 = vpop.f32.mrb[0].mxu0
  %v1141 = vpop.f32.mrb[0].mxu0
  %v1142 = vadd.f32 %v166, %v1141
  %v1143 = vpop.f32.mrb[0].mxu0
  %1144 = vdwg.mxu0
  %1145 = vst [vmem:[%s3] sm:$0xff] %v635
  %1146 = vst [vmem:[%s3 + $0x8] sm:$0xff] %v638
  %1147 = vst [vmem:[%s3 + $0x10] sm:$0xff] %v643
  %1148 = vst [vmem:[%s3 + $0x18] sm:$0xff] %v646
  %1149 = vst [vmem:[%s3 + $0x20] sm:$0xff] %v651
  %1150 = vst [vmem:[%s3 + $0x28] sm:$0xff] %v654
  %1151 = vst [vmem:[%s3 + $0x30] sm:$0xff] %v659
  %1152 = vst [vmem:[%s3 + $0x38] sm:$0xff] %v662
  %1153 = vst [vmem:[%s3 + $0x40] sm:$0xff] %v667
  %1154 = vst [vmem:[%s3 + $0x48] sm:$0xff] %v670
  %1155 = vst [vmem:[%s3 + $0x50] sm:$0xff] %v675
  %1156 = vst [vmem:[%s3 + $0x58] sm:$0xff] %v678
  %1157 = vst [vmem:[%s3 + $0x60] sm:$0xff] %v683
  %1158 = vst [vmem:[%s3 + $0x68] sm:$0xff] %v686
  %1159 = vst [vmem:[%s3 + $0x70] sm:$0xff] %v691
  %1160 = vst [vmem:[%s3 + $0x78] sm:$0xff] %v694
  %1161 = vst [vmem:[%s3 + $0x80] sm:$0xff] %v699
  %1162 = vst [vmem:[%s3 + $0x88] sm:$0xff] %v702
  %1163 = vst [vmem:[%s3 + $0x90] sm:$0xff] %v707
  %1164 = vst [vmem:[%s3 + $0x98] sm:$0xff] %v710
  %1165 = vst [vmem:[%s3 + $0xa0] sm:$0xff] %v715
  %1166 = vst [vmem:[%s3 + $0xa8] sm:$0xff] %v718
  %1167 = vst [vmem:[%s3 + $0xb0] sm:$0xff] %v723
  %1168 = vst [vmem:[%s3 + $0xb8] sm:$0xff] %v726
  %1169 = vst [vmem:[%s3 + $0xc0] sm:$0xff] %v731
  %1170 = vst [vmem:[%s3 + $0xc8] sm:$0xff] %v734
  %1171 = vst [vmem:[%s3 + $0xd0] sm:$0xff] %v739
  %1172 = vst [vmem:[%s3 + $0xd8] sm:$0xff] %v742
  %1173 = vst [vmem:[%s3 + $0xe0] sm:$0xff] %v747
  %1174 = vst [vmem:[%s3 + $0xe8] sm:$0xff] %v750
  %1175 = vst [vmem:[%s3 + $0xf0] sm:$0xff] %v755
  %1176 = vst [vmem:[%s3 + $0xf8] sm:$0xff] %v758
  %1177 = vst [vmem:[%s3 + $0x100] sm:$0xff] %v763
  %1178 = vst [vmem:[%s3 + $0x108] sm:$0xff] %v766
  %1179 = vst [vmem:[%s3 + $0x110] sm:$0xff] %v771
  %1180 = vst [vmem:[%s3 + $0x118] sm:$0xff] %v774
  %1181 = vst [vmem:[%s3 + $0x120] sm:$0xff] %v779
  %1182 = vst [vmem:[%s3 + $0x128] sm:$0xff] %v782
  %1183 = vst [vmem:[%s3 + $0x130] sm:$0xff] %v787
  %1184 = vst [vmem:[%s3 + $0x138] sm:$0xff] %v790
  %1185 = vst [vmem:[%s3 + $0x140] sm:$0xff] %v795
  %1186 = vst [vmem:[%s3 + $0x148] sm:$0xff] %v798
  %1187 = vst [vmem:[%s3 + $0x150] sm:$0xff] %v803
  %1188 = vst [vmem:[%s3 + $0x158] sm:$0xff] %v806
  %1189 = vst [vmem:[%s3 + $0x160] sm:$0xff] %v811
  %1190 = vst [vmem:[%s3 + $0x168] sm:$0xff] %v814
  %1191 = vst [vmem:[%s3 + $0x170] sm:$0xff] %v819
  %1192 = vst [vmem:[%s3 + $0x178] sm:$0xff] %v822
  %1193 = vst [vmem:[%s3 + $0x180] sm:$0xff] %v827
  %1194 = vst [vmem:[%s3 + $0x188] sm:$0xff] %v830
  %1195 = vst [vmem:[%s3 + $0x190] sm:$0xff] %v835
  %1196 = vst [vmem:[%s3 + $0x198] sm:$0xff] %v838
  %1197 = vst [vmem:[%s3 + $0x1a0] sm:$0xff] %v843
  %1198 = vst [vmem:[%s3 + $0x1a8] sm:$0xff] %v846
  %1199 = vst [vmem:[%s3 + $0x1b0] sm:$0xff] %v851
  %1200 = vst [vmem:[%s3 + $0x1b8] sm:$0xff] %v854
  %1201 = vst [vmem:[%s3 + $0x1c0] sm:$0xff] %v859
  %1202 = vst [vmem:[%s3 + $0x1c8] sm:$0xff] %v862
  %1203 = vst [vmem:[%s3 + $0x1d0] sm:$0xff] %v867
  %1204 = vst [vmem:[%s3 + $0x1d8] sm:$0xff] %v870
  %1205 = vst [vmem:[%s3 + $0x1e0] sm:$0xff] %v875
  %1206 = vst [vmem:[%s3 + $0x1e8] sm:$0xff] %v878
  %1207 = vst [vmem:[%s3 + $0x1f0] sm:$0xff] %v883
  %1208 = vst [vmem:[%s3 + $0x1f8] sm:$0xff] %v886
  %1209 = vst [vmem:[%s3 + $0x200] sm:$0xff] %v891
  %1210 = vst [vmem:[%s3 + $0x208] sm:$0xff] %v894
  %1211 = vst [vmem:[%s3 + $0x210] sm:$0xff] %v899
  %1212 = vst [vmem:[%s3 + $0x218] sm:$0xff] %v902
  %1213 = vst [vmem:[%s3 + $0x220] sm:$0xff] %v907
  %1214 = vst [vmem:[%s3 + $0x228] sm:$0xff] %v910
  %1215 = vst [vmem:[%s3 + $0x230] sm:$0xff] %v915
  %1216 = vst [vmem:[%s3 + $0x238] sm:$0xff] %v918
  %1217 = vst [vmem:[%s3 + $0x240] sm:$0xff] %v923
  %1218 = vst [vmem:[%s3 + $0x248] sm:$0xff] %v926
  %1219 = vst [vmem:[%s3 + $0x250] sm:$0xff] %v931
  %1220 = vst [vmem:[%s3 + $0x258] sm:$0xff] %v934
  %1221 = vst [vmem:[%s3 + $0x260] sm:$0xff] %v939
  %1222 = vst [vmem:[%s3 + $0x268] sm:$0xff] %v942
  %1223 = vst [vmem:[%s3 + $0x270] sm:$0xff] %v947
  %1224 = vst [vmem:[%s3 + $0x278] sm:$0xff] %v950
  %1225 = vst [vmem:[%s3 + $0x280] sm:$0xff] %v955
  %1226 = vst [vmem:[%s3 + $0x288] sm:$0xff] %v958
  %1227 = vst [vmem:[%s3 + $0x290] sm:$0xff] %v963
  %1228 = vst [vmem:[%s3 + $0x298] sm:$0xff] %v966
  %1229 = vst [vmem:[%s3 + $0x2a0] sm:$0xff] %v971
  %1230 = vst [vmem:[%s3 + $0x2a8] sm:$0xff] %v974
  %1231 = vst [vmem:[%s3 + $0x2b0] sm:$0xff] %v979
  %1232 = vst [vmem:[%s3 + $0x2b8] sm:$0xff] %v982
  %1233 = vst [vmem:[%s3 + $0x2c0] sm:$0xff] %v987
  %1234 = vst [vmem:[%s3 + $0x2c8] sm:$0xff] %v990
  %1235 = vst [vmem:[%s3 + $0x2d0] sm:$0xff] %v995
  %1236 = vst [vmem:[%s3 + $0x2d8] sm:$0xff] %v998
  %1237 = vst [vmem:[%s3 + $0x2e0] sm:$0xff] %v1003
  %1238 = vst [vmem:[%s3 + $0x2e8] sm:$0xff] %v1006
  %1239 = vst [vmem:[%s3 + $0x2f0] sm:$0xff] %v1011
  %1240 = vst [vmem:[%s3 + $0x2f8] sm:$0xff] %v1014
  %1241 = vst [vmem:[%s3 + $0x300] sm:$0xff] %v1019
  %1242 = vst [vmem:[%s3 + $0x308] sm:$0xff] %v1022
  %1243 = vst [vmem:[%s3 + $0x310] sm:$0xff] %v1027
  %1244 = vst [vmem:[%s3 + $0x318] sm:$0xff] %v1030
  %1245 = vst [vmem:[%s3 + $0x320] sm:$0xff] %v1035
  %1246 = vst [vmem:[%s3 + $0x328] sm:$0xff] %v1038
  %1247 = vst [vmem:[%s3 + $0x330] sm:$0xff] %v1043
  %1248 = vst [vmem:[%s3 + $0x338] sm:$0xff] %v1046
  %1249 = vst [vmem:[%s3 + $0x340] sm:$0xff] %v1051
  %1250 = vst [vmem:[%s3 + $0x348] sm:$0xff] %v1054
  %1251 = vst [vmem:[%s3 + $0x350] sm:$0xff] %v1059
  %1252 = vst [vmem:[%s3 + $0x358] sm:$0xff] %v1062
  %1253 = vst [vmem:[%s3 + $0x360] sm:$0xff] %v1067
  %1254 = vst [vmem:[%s3 + $0x368] sm:$0xff] %v1070
  %1255 = vst [vmem:[%s3 + $0x370] sm:$0xff] %v1075
  %1256 = vst [vmem:[%s3 + $0x378] sm:$0xff] %v1078
  %1257 = vst [vmem:[%s3 + $0x380] sm:$0xff] %v1083
  %1258 = vst [vmem:[%s3 + $0x388] sm:$0xff] %v1086
  %1259 = vst [vmem:[%s3 + $0x390] sm:$0xff] %v1091
  %1260 = vst [vmem:[%s3 + $0x398] sm:$0xff] %v1094
  %1261 = vst [vmem:[%s3 + $0x3a0] sm:$0xff] %v1099
  %1262 = vst [vmem:[%s3 + $0x3a8] sm:$0xff] %v1102
  %1263 = vst [vmem:[%s3 + $0x3b0] sm:$0xff] %v1107
  %1264 = vst [vmem:[%s3 + $0x3b8] sm:$0xff] %v1110
  %1265 = vst [vmem:[%s3 + $0x3c0] sm:$0xff] %v1115
  %1266 = vst [vmem:[%s3 + $0x3c8] sm:$0xff] %v1118
  %1267 = vst [vmem:[%s3 + $0x3d0] sm:$0xff] %v1123
  %1268 = vst [vmem:[%s3 + $0x3d8] sm:$0xff] %v1126
  %1269 = vst [vmem:[%s3 + $0x3e0] sm:$0xff] %v1131
  %1270 = vst [vmem:[%s3 + $0x3e8] sm:$0xff] %v1134
  %1271 = vst [vmem:[%s3 + $0x3f0] sm:$0xff] %v1139
  %1272 = vst [vmem:[%s3 + $0x3f8] sm:$0xff] %v1142
  %s1273 = smul.u32 0, 1024
  %v1274 = vlaneseq
  %v1275 = vshrl.u32 %v1274, 7
  %v1276 = vadd.s32 %v1275, 8
  %v1277 = vadd.s32 %v1275, 16
  %v1278 = vadd.s32 %v1275, 24
  %v1279 = vadd.s32 %v1275, 32
  %v1280 = vadd.s32 %v1275, 40
  %v1281 = vadd.s32 %v1275, 48
  %v1282 = vadd.s32 %v1275, 56
  %v1283 = vadd.s32 %v1275, 64
  %v1284 = vadd.s32 %v1275, 72
  %v1285 = vadd.s32 %v1275, 80
  %v1286 = vadd.s32 %v1275, 88
  %v1287 = vadd.s32 %v1275, 96
  %v1288 = vadd.s32 %v1275, 104
  %v1289 = vadd.s32 %v1275, 112
  %v1290 = vadd.s32 %v1275, 120
  %v1291 = vadd.s32 %v1275, 128
  %v1292 = vadd.s32 %v1275, 136
  %v1293 = vadd.s32 %v1275, 144
  %v1294 = vadd.s32 %v1275, 152
  %v1295 = vadd.s32 %v1275, 160
  %v1296 = vadd.s32 %v1275, 168
  %v1297 = vadd.s32 %v1275, 176
  %v1298 = vadd.s32 %v1275, 184
  %v1299 = vadd.s32 %v1275, 192
  %v1300 = vadd.s32 %v1275, 200
  %v1301 = vadd.s32 %v1275, 208
  %v1302 = vadd.s32 %v1275, 216
  %v1303 = vadd.s32 %v1275, 224
  %v1304 = vadd.s32 %v1275, 232
  %v1305 = vadd.s32 %v1275, 240
  %v1306 = vadd.s32 %v1275, 248
  %v1307 = vadd.s32 %v1275, 256
  %v1308 = vadd.s32 %v1275, 264
  %v1309 = vadd.s32 %v1275, 272
  %v1310 = vadd.s32 %v1275, 280
  %v1311 = vadd.s32 %v1275, 288
  %v1312 = vadd.s32 %v1275, 296
  %v1313 = vadd.s32 %v1275, 304
  %v1314 = vadd.s32 %v1275, 312
  %v1315 = vadd.s32 %v1275, 320
  %v1316 = vadd.s32 %v1275, 328
  %v1317 = vadd.s32 %v1275, 336
  %v1318 = vadd.s32 %v1275, 344
  %v1319 = vadd.s32 %v1275, 352
  %v1320 = vadd.s32 %v1275, 360
  %v1321 = vadd.s32 %v1275, 368
  %v1322 = vadd.s32 %v1275, 376
  %v1323 = vadd.s32 %v1275, 384
  %v1324 = vadd.s32 %v1275, 392
  %v1325 = vadd.s32 %v1275, 400
  %v1326 = vadd.s32 %v1275, 408
  %v1327 = vadd.s32 %v1275, 416
  %v1328 = vadd.s32 %v1275, 424
  %v1329 = vadd.s32 %v1275, 432
  %v1330 = vadd.s32 %v1275, 440
  %v1331 = vadd.s32 %v1275, 448
  %v1332 = vadd.s32 %v1275, 456
  %v1333 = vadd.s32 %v1275, 464
  %v1334 = vadd.s32 %v1275, 472
  %v1335 = vadd.s32 %v1275, 480
  %v1336 = vadd.s32 %v1275, 488
  %v1337 = vadd.s32 %v1275, 496
  %v1338 = vadd.s32 %v1275, 504
  %v1339 = vadd.s32 %v1275, 512
  %v1340 = vadd.s32 %v1275, 520
  %v1341 = vadd.s32 %v1275, 528
  %v1342 = vadd.s32 %v1275, 536
  %v1343 = vadd.s32 %v1275, 544
  %v1344 = vadd.s32 %v1275, 552
  %v1345 = vadd.s32 %v1275, 560
  %v1346 = vadd.s32 %v1275, 568
  %v1347 = vadd.s32 %v1275, 576
  %v1348 = vadd.s32 %v1275, 584
  %v1349 = vadd.s32 %v1275, 592
  %v1350 = vadd.s32 %v1275, 600
  %v1351 = vadd.s32 %v1275, 608
  %v1352 = vadd.s32 %v1275, 616
  %v1353 = vadd.s32 %v1275, 624
  %v1354 = vadd.s32 %v1275, 632
  %v1355 = vadd.s32 %v1275, 640
  %v1356 = vadd.s32 %v1275, 648
  %v1357 = vadd.s32 %v1275, 656
  %v1358 = vadd.s32 %v1275, 664
  %v1359 = vadd.s32 %v1275, 672
  %v1360 = vadd.s32 %v1275, 680
  %v1361 = vadd.s32 %v1275, 688
  %v1362 = vadd.s32 %v1275, 696
  %v1363 = vadd.s32 %v1275, 704
  %v1364 = vadd.s32 %v1275, 712
  %v1365 = vadd.s32 %v1275, 720
  %v1366 = vadd.s32 %v1275, 728
  %v1367 = vadd.s32 %v1275, 736
  %v1368 = vadd.s32 %v1275, 744
  %v1369 = vadd.s32 %v1275, 752
  %v1370 = vadd.s32 %v1275, 760
  %v1371 = vadd.s32 %v1275, 768
  %v1372 = vadd.s32 %v1275, 776
  %v1373 = vadd.s32 %v1275, 784
  %v1374 = vadd.s32 %v1275, 792
  %v1375 = vadd.s32 %v1275, 800
  %v1376 = vadd.s32 %v1275, 808
  %v1377 = vadd.s32 %v1275, 816
  %v1378 = vadd.s32 %v1275, 824
  %v1379 = vadd.s32 %v1275, 832
  %v1380 = vadd.s32 %v1275, 840
  %v1381 = vadd.s32 %v1275, 848
  %v1382 = vadd.s32 %v1275, 856
  %v1383 = vadd.s32 %v1275, 864
  %v1384 = vadd.s32 %v1275, 872
  %v1385 = vadd.s32 %v1275, 880
  %v1386 = vadd.s32 %v1275, 888
  %v1387 = vadd.s32 %v1275, 896
  %v1388 = vadd.s32 %v1275, 904
  %v1389 = vadd.s32 %v1275, 912
  %v1390 = vadd.s32 %v1275, 920
  %v1391 = vadd.s32 %v1275, 928
  %v1392 = vadd.s32 %v1275, 936
  %v1393 = vadd.s32 %v1275, 944
  %v1394 = vadd.s32 %v1275, 952
  %v1395 = vadd.s32 %v1275, 960
  %v1396 = vadd.s32 %v1275, 968
  %v1397 = vadd.s32 %v1275, 976
  %v1398 = vadd.s32 %v1275, 984
  %v1399 = vadd.s32 %v1275, 992
  %v1400 = vadd.s32 %v1275, 1000
  %v1401 = vadd.s32 %v1275, 1008
  %v1402 = vadd.s32 %v1275, 1016
  %v1403 = vstv %s1273
  %v1404 = vadd.s32 %v1403, %v1275
  %v1405 = vadd.s32 %v1403, %v1276
  %v1406 = vadd.s32 %v1403, %v1277
  %v1407 = vadd.s32 %v1403, %v1278
  %v1408 = vadd.s32 %v1403, %v1279
  %v1409 = vadd.s32 %v1403, %v1280
  %v1410 = vadd.s32 %v1403, %v1281
  %v1411 = vadd.s32 %v1403, %v1282
  %v1412 = vadd.s32 %v1403, %v1283
  %v1413 = vadd.s32 %v1403, %v1284
  %v1414 = vadd.s32 %v1403, %v1285
  %v1415 = vadd.s32 %v1403, %v1286
  %v1416 = vadd.s32 %v1403, %v1287
  %v1417 = vadd.s32 %v1403, %v1288
  %v1418 = vadd.s32 %v1403, %v1289
  %v1419 = vadd.s32 %v1403, %v1290
  %v1420 = vadd.s32 %v1403, %v1291
  %v1421 = vadd.s32 %v1403, %v1292
  %v1422 = vadd.s32 %v1403, %v1293
  %v1423 = vadd.s32 %v1403, %v1294
  %v1424 = vadd.s32 %v1403, %v1295
  %v1425 = vadd.s32 %v1403, %v1296
  %v1426 = vadd.s32 %v1403, %v1297
  %v1427 = vadd.s32 %v1403, %v1298
  %v1428 = vadd.s32 %v1403, %v1299
  %v1429 = vadd.s32 %v1403, %v1300
  %v1430 = vadd.s32 %v1403, %v1301
  %v1431 = vadd.s32 %v1403, %v1302
  %v1432 = vadd.s32 %v1403, %v1303
  %v1433 = vadd.s32 %v1403, %v1304
  %v1434 = vadd.s32 %v1403, %v1305
  %v1435 = vadd.s32 %v1403, %v1306
  %v1436 = vadd.s32 %v1403, %v1307
  %v1437 = vadd.s32 %v1403, %v1308
  %v1438 = vadd.s32 %v1403, %v1309
  %v1439 = vadd.s32 %v1403, %v1310
  %v1440 = vadd.s32 %v1403, %v1311
  %v1441 = vadd.s32 %v1403, %v1312
  %v1442 = vadd.s32 %v1403, %v1313
  %v1443 = vadd.s32 %v1403, %v1314
  %v1444 = vadd.s32 %v1403, %v1315
  %v1445 = vadd.s32 %v1403, %v1316
  %v1446 = vadd.s32 %v1403, %v1317
  %v1447 = vadd.s32 %v1403, %v1318
  %v1448 = vadd.s32 %v1403, %v1319
  %v1449 = vadd.s32 %v1403, %v1320
  %v1450 = vadd.s32 %v1403, %v1321
  %v1451 = vadd.s32 %v1403, %v1322
  %v1452 = vadd.s32 %v1403, %v1323
  %v1453 = vadd.s32 %v1403, %v1324
  %v1454 = vadd.s32 %v1403, %v1325
  %v1455 = vadd.s32 %v1403, %v1326
  %v1456 = vadd.s32 %v1403, %v1327
  %v1457 = vadd.s32 %v1403, %v1328
  %v1458 = vadd.s32 %v1403, %v1329
  %v1459 = vadd.s32 %v1403, %v1330
  %v1460 = vadd.s32 %v1403, %v1331
  %v1461 = vadd.s32 %v1403, %v1332
  %v1462 = vadd.s32 %v1403, %v1333
  %v1463 = vadd.s32 %v1403, %v1334
  %v1464 = vadd.s32 %v1403, %v1335
  %v1465 = vadd.s32 %v1403, %v1336
  %v1466 = vadd.s32 %v1403, %v1337
  %v1467 = vadd.s32 %v1403, %v1338
  %v1468 = vadd.s32 %v1403, %v1339
  %v1469 = vadd.s32 %v1403, %v1340
  %v1470 = vadd.s32 %v1403, %v1341
  %v1471 = vadd.s32 %v1403, %v1342
  %v1472 = vadd.s32 %v1403, %v1343
  %v1473 = vadd.s32 %v1403, %v1344
  %v1474 = vadd.s32 %v1403, %v1345
  %v1475 = vadd.s32 %v1403, %v1346
  %v1476 = vadd.s32 %v1403, %v1347
  %v1477 = vadd.s32 %v1403, %v1348
  %v1478 = vadd.s32 %v1403, %v1349
  %v1479 = vadd.s32 %v1403, %v1350
  %v1480 = vadd.s32 %v1403, %v1351
  %v1481 = vadd.s32 %v1403, %v1352
  %v1482 = vadd.s32 %v1403, %v1353
  %v1483 = vadd.s32 %v1403, %v1354
  %v1484 = vadd.s32 %v1403, %v1355
  %v1485 = vadd.s32 %v1403, %v1356
  %v1486 = vadd.s32 %v1403, %v1357
  %v1487 = vadd.s32 %v1403, %v1358
  %v1488 = vadd.s32 %v1403, %v1359
  %v1489 = vadd.s32 %v1403, %v1360
  %v1490 = vadd.s32 %v1403, %v1361
  %v1491 = vadd.s32 %v1403, %v1362
  %v1492 = vadd.s32 %v1403, %v1363
  %v1493 = vadd.s32 %v1403, %v1364
  %v1494 = vadd.s32 %v1403, %v1365
  %v1495 = vadd.s32 %v1403, %v1366
  %v1496 = vadd.s32 %v1403, %v1367
  %v1497 = vadd.s32 %v1403, %v1368
  %v1498 = vadd.s32 %v1403, %v1369
  %v1499 = vadd.s32 %v1403, %v1370
  %v1500 = vadd.s32 %v1403, %v1371
  %v1501 = vadd.s32 %v1403, %v1372
  %v1502 = vadd.s32 %v1403, %v1373
  %v1503 = vadd.s32 %v1403, %v1374
  %v1504 = vadd.s32 %v1403, %v1375
  %v1505 = vadd.s32 %v1403, %v1376
  %v1506 = vadd.s32 %v1403, %v1377
  %v1507 = vadd.s32 %v1403, %v1378
  %v1508 = vadd.s32 %v1403, %v1379
  %v1509 = vadd.s32 %v1403, %v1380
  %v1510 = vadd.s32 %v1403, %v1381
  %v1511 = vadd.s32 %v1403, %v1382
  %v1512 = vadd.s32 %v1403, %v1383
  %v1513 = vadd.s32 %v1403, %v1384
  %v1514 = vadd.s32 %v1403, %v1385
  %v1515 = vadd.s32 %v1403, %v1386
  %v1516 = vadd.s32 %v1403, %v1387
  %v1517 = vadd.s32 %v1403, %v1388
  %v1518 = vadd.s32 %v1403, %v1389
  %v1519 = vadd.s32 %v1403, %v1390
  %v1520 = vadd.s32 %v1403, %v1391
  %v1521 = vadd.s32 %v1403, %v1392
  %v1522 = vadd.s32 %v1403, %v1393
  %v1523 = vadd.s32 %v1403, %v1394
  %v1524 = vadd.s32 %v1403, %v1395
  %v1525 = vadd.s32 %v1403, %v1396
  %v1526 = vadd.s32 %v1403, %v1397
  %v1527 = vadd.s32 %v1403, %v1398
  %v1528 = vadd.s32 %v1403, %v1399
  %v1529 = vadd.s32 %v1403, %v1400
  %v1530 = vadd.s32 %v1403, %v1401
  %v1531 = vadd.s32 %v1403, %v1402
  %vm1532 = vcmp.lt.s32.totalorder %v1404, 1024
  %vm1533 = vcmp.lt.s32.totalorder %v1405, 1024
  %vm1534 = vcmp.lt.s32.totalorder %v1406, 1024
  %vm1535 = vcmp.lt.s32.totalorder %v1407, 1024
  %vm1536 = vcmp.lt.s32.totalorder %v1408, 1024
  %vm1537 = vcmp.lt.s32.totalorder %v1409, 1024
  %vm1538 = vcmp.lt.s32.totalorder %v1410, 1024
  %vm1539 = vcmp.lt.s32.totalorder %v1411, 1024
  %vm1540 = vcmp.lt.s32.totalorder %v1412, 1024
  %vm1541 = vcmp.lt.s32.totalorder %v1413, 1024
  %vm1542 = vcmp.lt.s32.totalorder %v1414, 1024
  %vm1543 = vcmp.lt.s32.totalorder %v1415, 1024
  %vm1544 = vcmp.lt.s32.totalorder %v1416, 1024
  %vm1545 = vcmp.lt.s32.totalorder %v1417, 1024
  %vm1546 = vcmp.lt.s32.totalorder %v1418, 1024
  %vm1547 = vcmp.lt.s32.totalorder %v1419, 1024
  %vm1548 = vcmp.lt.s32.totalorder %v1420, 1024
  %vm1549 = vcmp.lt.s32.totalorder %v1421, 1024
  %vm1550 = vcmp.lt.s32.totalorder %v1422, 1024
  %vm1551 = vcmp.lt.s32.totalorder %v1423, 1024
  %vm1552 = vcmp.lt.s32.totalorder %v1424, 1024
  %vm1553 = vcmp.lt.s32.totalorder %v1425, 1024
  %vm1554 = vcmp.lt.s32.totalorder %v1426, 1024
  %vm1555 = vcmp.lt.s32.totalorder %v1427, 1024
  %vm1556 = vcmp.lt.s32.totalorder %v1428, 1024
  %vm1557 = vcmp.lt.s32.totalorder %v1429, 1024
  %vm1558 = vcmp.lt.s32.totalorder %v1430, 1024
  %vm1559 = vcmp.lt.s32.totalorder %v1431, 1024
  %vm1560 = vcmp.lt.s32.totalorder %v1432, 1024
  %vm1561 = vcmp.lt.s32.totalorder %v1433, 1024
  %vm1562 = vcmp.lt.s32.totalorder %v1434, 1024
  %vm1563 = vcmp.lt.s32.totalorder %v1435, 1024
  %vm1564 = vcmp.lt.s32.totalorder %v1436, 1024
  %vm1565 = vcmp.lt.s32.totalorder %v1437, 1024
  %vm1566 = vcmp.lt.s32.totalorder %v1438, 1024
  %vm1567 = vcmp.lt.s32.totalorder %v1439, 1024
  %vm1568 = vcmp.lt.s32.totalorder %v1440, 1024
  %vm1569 = vcmp.lt.s32.totalorder %v1441, 1024
  %vm1570 = vcmp.lt.s32.totalorder %v1442, 1024
  %vm1571 = vcmp.lt.s32.totalorder %v1443, 1024
  %vm1572 = vcmp.lt.s32.totalorder %v1444, 1024
  %vm1573 = vcmp.lt.s32.totalorder %v1445, 1024
  %vm1574 = vcmp.lt.s32.totalorder %v1446, 1024
  %vm1575 = vcmp.lt.s32.totalorder %v1447, 1024
  %vm1576 = vcmp.lt.s32.totalorder %v1448, 1024
  %vm1577 = vcmp.lt.s32.totalorder %v1449, 1024
  %vm1578 = vcmp.lt.s32.totalorder %v1450, 1024
  %vm1579 = vcmp.lt.s32.totalorder %v1451, 1024
  %vm1580 = vcmp.lt.s32.totalorder %v1452, 1024
  %vm1581 = vcmp.lt.s32.totalorder %v1453, 1024
  %vm1582 = vcmp.lt.s32.totalorder %v1454, 1024
  %vm1583 = vcmp.lt.s32.totalorder %v1455, 1024
  %vm1584 = vcmp.lt.s32.totalorder %v1456, 1024
  %vm1585 = vcmp.lt.s32.totalorder %v1457, 1024
  %vm1586 = vcmp.lt.s32.totalorder %v1458, 1024
  %vm1587 = vcmp.lt.s32.totalorder %v1459, 1024
  %vm1588 = vcmp.lt.s32.totalorder %v1460, 1024
  %vm1589 = vcmp.lt.s32.totalorder %v1461, 1024
  %vm1590 = vcmp.lt.s32.totalorder %v1462, 1024
  %vm1591 = vcmp.lt.s32.totalorder %v1463, 1024
  %vm1592 = vcmp.lt.s32.totalorder %v1464, 1024
  %vm1593 = vcmp.lt.s32.totalorder %v1465, 1024
  %vm1594 = vcmp.lt.s32.totalorder %v1466, 1024
  %vm1595 = vcmp.lt.s32.totalorder %v1467, 1024
  %vm1596 = vcmp.lt.s32.totalorder %v1468, 1024
  %vm1597 = vcmp.lt.s32.totalorder %v1469, 1024
  %vm1598 = vcmp.lt.s32.totalorder %v1470, 1024
  %vm1599 = vcmp.lt.s32.totalorder %v1471, 1024
  %vm1600 = vcmp.lt.s32.totalorder %v1472, 1024
  %vm1601 = vcmp.lt.s32.totalorder %v1473, 1024
  %vm1602 = vcmp.lt.s32.totalorder %v1474, 1024
  %vm1603 = vcmp.lt.s32.totalorder %v1475, 1024
  %vm1604 = vcmp.lt.s32.totalorder %v1476, 1024
  %vm1605 = vcmp.lt.s32.totalorder %v1477, 1024
  %vm1606 = vcmp.lt.s32.totalorder %v1478, 1024
  %vm1607 = vcmp.lt.s32.totalorder %v1479, 1024
  %vm1608 = vcmp.lt.s32.totalorder %v1480, 1024
  %vm1609 = vcmp.lt.s32.totalorder %v1481, 1024
  %vm1610 = vcmp.lt.s32.totalorder %v1482, 1024
  %vm1611 = vcmp.lt.s32.totalorder %v1483, 1024
  %vm1612 = vcmp.lt.s32.totalorder %v1484, 1024
  %vm1613 = vcmp.lt.s32.totalorder %v1485, 1024
  %vm1614 = vcmp.lt.s32.totalorder %v1486, 1024
  %vm1615 = vcmp.lt.s32.totalorder %v1487, 1024
  %vm1616 = vcmp.lt.s32.totalorder %v1488, 1024
  %vm1617 = vcmp.lt.s32.totalorder %v1489, 1024
  %vm1618 = vcmp.lt.s32.totalorder %v1490, 1024
  %vm1619 = vcmp.lt.s32.totalorder %v1491, 1024
  %vm1620 = vcmp.lt.s32.totalorder %v1492, 1024
  %vm1621 = vcmp.lt.s32.totalorder %v1493, 1024
  %vm1622 = vcmp.lt.s32.totalorder %v1494, 1024
  %vm1623 = vcmp.lt.s32.totalorder %v1495, 1024
  %vm1624 = vcmp.lt.s32.totalorder %v1496, 1024
  %vm1625 = vcmp.lt.s32.totalorder %v1497, 1024
  %vm1626 = vcmp.lt.s32.totalorder %v1498, 1024
  %vm1627 = vcmp.lt.s32.totalorder %v1499, 1024
  %vm1628 = vcmp.lt.s32.totalorder %v1500, 1024
  %vm1629 = vcmp.lt.s32.totalorder %v1501, 1024
  %vm1630 = vcmp.lt.s32.totalorder %v1502, 1024
  %vm1631 = vcmp.lt.s32.totalorder %v1503, 1024
  %vm1632 = vcmp.lt.s32.totalorder %v1504, 1024
  %vm1633 = vcmp.lt.s32.totalorder %v1505, 1024
  %vm1634 = vcmp.lt.s32.totalorder %v1506, 1024
  %vm1635 = vcmp.lt.s32.totalorder %v1507, 1024
  %vm1636 = vcmp.lt.s32.totalorder %v1508, 1024
  %vm1637 = vcmp.lt.s32.totalorder %v1509, 1024
  %vm1638 = vcmp.lt.s32.totalorder %v1510, 1024
  %vm1639 = vcmp.lt.s32.totalorder %v1511, 1024
  %vm1640 = vcmp.lt.s32.totalorder %v1512, 1024
  %vm1641 = vcmp.lt.s32.totalorder %v1513, 1024
  %vm1642 = vcmp.lt.s32.totalorder %v1514, 1024
  %vm1643 = vcmp.lt.s32.totalorder %v1515, 1024
  %vm1644 = vcmp.lt.s32.totalorder %v1516, 1024
  %vm1645 = vcmp.lt.s32.totalorder %v1517, 1024
  %vm1646 = vcmp.lt.s32.totalorder %v1518, 1024
  %vm1647 = vcmp.lt.s32.totalorder %v1519, 1024
  %vm1648 = vcmp.lt.s32.totalorder %v1520, 1024
  %vm1649 = vcmp.lt.s32.totalorder %v1521, 1024
  %vm1650 = vcmp.lt.s32.totalorder %v1522, 1024
  %vm1651 = vcmp.lt.s32.totalorder %v1523, 1024
  %vm1652 = vcmp.lt.s32.totalorder %v1524, 1024
  %vm1653 = vcmp.lt.s32.totalorder %v1525, 1024
  %vm1654 = vcmp.lt.s32.totalorder %v1526, 1024
  %vm1655 = vcmp.lt.s32.totalorder %v1527, 1024
  %vm1656 = vcmp.lt.s32.totalorder %v1528, 1024
  %vm1657 = vcmp.lt.s32.totalorder %v1529, 1024
  %vm1658 = vcmp.lt.s32.totalorder %v1530, 1024
  %vm1659 = vcmp.lt.s32.totalorder %v1531, 1024
  %v1660 = vsel %vm1532, 1, 0
  %v1661 = vsel %vm1533, 1, 0
  %v1662 = vsel %vm1534, 1, 0
  %v1663 = vsel %vm1535, 1, 0
  %v1664 = vsel %vm1536, 1, 0
  %v1665 = vsel %vm1537, 1, 0
  %v1666 = vsel %vm1538, 1, 0
  %v1667 = vsel %vm1539, 1, 0
  %v1668 = vsel %vm1540, 1, 0
  %v1669 = vsel %vm1541, 1, 0
  %v1670 = vsel %vm1542, 1, 0
  %v1671 = vsel %vm1543, 1, 0
  %v1672 = vsel %vm1544, 1, 0
  %v1673 = vsel %vm1545, 1, 0
  %v1674 = vsel %vm1546, 1, 0
  %v1675 = vsel %vm1547, 1, 0
  %v1676 = vsel %vm1548, 1, 0
  %v1677 = vsel %vm1549, 1, 0
  %v1678 = vsel %vm1550, 1, 0
  %v1679 = vsel %vm1551, 1, 0
  %v1680 = vsel %vm1552, 1, 0
  %v1681 = vsel %vm1553, 1, 0
  %v1682 = vsel %vm1554, 1, 0
  %v1683 = vsel %vm1555, 1, 0
  %v1684 = vsel %vm1556, 1, 0
  %v1685 = vsel %vm1557, 1, 0
  %v1686 = vsel %vm1558, 1, 0
  %v1687 = vsel %vm1559, 1, 0
  %v1688 = vsel %vm1560, 1, 0
  %v1689 = vsel %vm1561, 1, 0
  %v1690 = vsel %vm1562, 1, 0
  %v1691 = vsel %vm1563, 1, 0
  %v1692 = vsel %vm1564, 1, 0
  %v1693 = vsel %vm1565, 1, 0
  %v1694 = vsel %vm1566, 1, 0
  %v1695 = vsel %vm1567, 1, 0
  %v1696 = vsel %vm1568, 1, 0
  %v1697 = vsel %vm1569, 1, 0
  %v1698 = vsel %vm1570, 1, 0
  %v1699 = vsel %vm1571, 1, 0
  %v1700 = vsel %vm1572, 1, 0
  %v1701 = vsel %vm1573, 1, 0
  %v1702 = vsel %vm1574, 1, 0
  %v1703 = vsel %vm1575, 1, 0
  %v1704 = vsel %vm1576, 1, 0
  %v1705 = vsel %vm1577, 1, 0
  %v1706 = vsel %vm1578, 1, 0
  %v1707 = vsel %vm1579, 1, 0
  %v1708 = vsel %vm1580, 1, 0
  %v1709 = vsel %vm1581, 1, 0
  %v1710 = vsel %vm1582, 1, 0
  %v1711 = vsel %vm1583, 1, 0
  %v1712 = vsel %vm1584, 1, 0
  %v1713 = vsel %vm1585, 1, 0
  %v1714 = vsel %vm1586, 1, 0
  %v1715 = vsel %vm1587, 1, 0
  %v1716 = vsel %vm1588, 1, 0
  %v1717 = vsel %vm1589, 1, 0
  %v1718 = vsel %vm1590, 1, 0
  %v1719 = vsel %vm1591, 1, 0
  %v1720 = vsel %vm1592, 1, 0
  %v1721 = vsel %vm1593, 1, 0
  %v1722 = vsel %vm1594, 1, 0
  %v1723 = vsel %vm1595, 1, 0
  %v1724 = vsel %vm1596, 1, 0
  %v1725 = vsel %vm1597, 1, 0
  %v1726 = vsel %vm1598, 1, 0
  %v1727 = vsel %vm1599, 1, 0
  %v1728 = vsel %vm1600, 1, 0
  %v1729 = vsel %vm1601, 1, 0
  %v1730 = vsel %vm1602, 1, 0
  %v1731 = vsel %vm1603, 1, 0
  %v1732 = vsel %vm1604, 1, 0
  %v1733 = vsel %vm1605, 1, 0
  %v1734 = vsel %vm1606, 1, 0
  %v1735 = vsel %vm1607, 1, 0
  %v1736 = vsel %vm1608, 1, 0
  %v1737 = vsel %vm1609, 1, 0
  %v1738 = vsel %vm1610, 1, 0
  %v1739 = vsel %vm1611, 1, 0
  %v1740 = vsel %vm1612, 1, 0
  %v1741 = vsel %vm1613, 1, 0
  %v1742 = vsel %vm1614, 1, 0
  %v1743 = vsel %vm1615, 1, 0
  %v1744 = vsel %vm1616, 1, 0
  %v1745 = vsel %vm1617, 1, 0
  %v1746 = vsel %vm1618, 1, 0
  %v1747 = vsel %vm1619, 1, 0
  %v1748 = vsel %vm1620, 1, 0
  %v1749 = vsel %vm1621, 1, 0
  %v1750 = vsel %vm1622, 1, 0
  %v1751 = vsel %vm1623, 1, 0
  %v1752 = vsel %vm1624, 1, 0
  %v1753 = vsel %vm1625, 1, 0
  %v1754 = vsel %vm1626, 1, 0
  %v1755 = vsel %vm1627, 1, 0
  %v1756 = vsel %vm1628, 1, 0
  %v1757 = vsel %vm1629, 1, 0
  %v1758 = vsel %vm1630, 1, 0
  %v1759 = vsel %vm1631, 1, 0
  %v1760 = vsel %vm1632, 1, 0
  %v1761 = vsel %vm1633, 1, 0
  %v1762 = vsel %vm1634, 1, 0
  %v1763 = vsel %vm1635, 1, 0
  %v1764 = vsel %vm1636, 1, 0
  %v1765 = vsel %vm1637, 1, 0
  %v1766 = vsel %vm1638, 1, 0
  %v1767 = vsel %vm1639, 1, 0
  %v1768 = vsel %vm1640, 1, 0
  %v1769 = vsel %vm1641, 1, 0
  %v1770 = vsel %vm1642, 1, 0
  %v1771 = vsel %vm1643, 1, 0
  %v1772 = vsel %vm1644, 1, 0
  %v1773 = vsel %vm1645, 1, 0
  %v1774 = vsel %vm1646, 1, 0
  %v1775 = vsel %vm1647, 1, 0
  %v1776 = vsel %vm1648, 1, 0
  %v1777 = vsel %vm1649, 1, 0
  %v1778 = vsel %vm1650, 1, 0
  %v1779 = vsel %vm1651, 1, 0
  %v1780 = vsel %vm1652, 1, 0
  %v1781 = vsel %vm1653, 1, 0
  %v1782 = vsel %vm1654, 1, 0
  %v1783 = vsel %vm1655, 1, 0
  %v1784 = vsel %vm1656, 1, 0
  %v1785 = vsel %vm1657, 1, 0
  %v1786 = vsel %vm1658, 1, 0
  %v1787 = vsel %vm1659, 1, 0
  %vm1788 = vcmp.eq.s32.totalorder %v1660, 1
  %vm1789 = vcmp.eq.s32.totalorder %v1661, 1
  %vm1790 = vcmp.eq.s32.totalorder %v1662, 1
  %vm1791 = vcmp.eq.s32.totalorder %v1663, 1
  %vm1792 = vcmp.eq.s32.totalorder %v1664, 1
  %vm1793 = vcmp.eq.s32.totalorder %v1665, 1
  %vm1794 = vcmp.eq.s32.totalorder %v1666, 1
  %vm1795 = vcmp.eq.s32.totalorder %v1667, 1
  %vm1796 = vcmp.eq.s32.totalorder %v1668, 1
  %vm1797 = vcmp.eq.s32.totalorder %v1669, 1
  %vm1798 = vcmp.eq.s32.totalorder %v1670, 1
  %vm1799 = vcmp.eq.s32.totalorder %v1671, 1
  %vm1800 = vcmp.eq.s32.totalorder %v1672, 1
  %vm1801 = vcmp.eq.s32.totalorder %v1673, 1
  %vm1802 = vcmp.eq.s32.totalorder %v1674, 1
  %vm1803 = vcmp.eq.s32.totalorder %v1675, 1
  %vm1804 = vcmp.eq.s32.totalorder %v1676, 1
  %vm1805 = vcmp.eq.s32.totalorder %v1677, 1
  %vm1806 = vcmp.eq.s32.totalorder %v1678, 1
  %vm1807 = vcmp.eq.s32.totalorder %v1679, 1
  %vm1808 = vcmp.eq.s32.totalorder %v1680, 1
  %vm1809 = vcmp.eq.s32.totalorder %v1681, 1
  %vm1810 = vcmp.eq.s32.totalorder %v1682, 1
  %vm1811 = vcmp.eq.s32.totalorder %v1683, 1
  %vm1812 = vcmp.eq.s32.totalorder %v1684, 1
  %vm1813 = vcmp.eq.s32.totalorder %v1685, 1
  %vm1814 = vcmp.eq.s32.totalorder %v1686, 1
  %vm1815 = vcmp.eq.s32.totalorder %v1687, 1
  %vm1816 = vcmp.eq.s32.totalorder %v1688, 1
  %vm1817 = vcmp.eq.s32.totalorder %v1689, 1
  %vm1818 = vcmp.eq.s32.totalorder %v1690, 1
  %vm1819 = vcmp.eq.s32.totalorder %v1691, 1
  %vm1820 = vcmp.eq.s32.totalorder %v1692, 1
  %vm1821 = vcmp.eq.s32.totalorder %v1693, 1
  %vm1822 = vcmp.eq.s32.totalorder %v1694, 1
  %vm1823 = vcmp.eq.s32.totalorder %v1695, 1
  %vm1824 = vcmp.eq.s32.totalorder %v1696, 1
  %vm1825 = vcmp.eq.s32.totalorder %v1697, 1
  %vm1826 = vcmp.eq.s32.totalorder %v1698, 1
  %vm1827 = vcmp.eq.s32.totalorder %v1699, 1
  %vm1828 = vcmp.eq.s32.totalorder %v1700, 1
  %vm1829 = vcmp.eq.s32.totalorder %v1701, 1
  %vm1830 = vcmp.eq.s32.totalorder %v1702, 1
  %vm1831 = vcmp.eq.s32.totalorder %v1703, 1
  %vm1832 = vcmp.eq.s32.totalorder %v1704, 1
  %vm1833 = vcmp.eq.s32.totalorder %v1705, 1
  %vm1834 = vcmp.eq.s32.totalorder %v1706, 1
  %vm1835 = vcmp.eq.s32.totalorder %v1707, 1
  %vm1836 = vcmp.eq.s32.totalorder %v1708, 1
  %vm1837 = vcmp.eq.s32.totalorder %v1709, 1
  %vm1838 = vcmp.eq.s32.totalorder %v1710, 1
  %vm1839 = vcmp.eq.s32.totalorder %v1711, 1
  %vm1840 = vcmp.eq.s32.totalorder %v1712, 1
  %vm1841 = vcmp.eq.s32.totalorder %v1713, 1
  %vm1842 = vcmp.eq.s32.totalorder %v1714, 1
  %vm1843 = vcmp.eq.s32.totalorder %v1715, 1
  %vm1844 = vcmp.eq.s32.totalorder %v1716, 1
  %vm1845 = vcmp.eq.s32.totalorder %v1717, 1
  %vm1846 = vcmp.eq.s32.totalorder %v1718, 1
  %vm1847 = vcmp.eq.s32.totalorder %v1719, 1
  %vm1848 = vcmp.eq.s32.totalorder %v1720, 1
  %vm1849 = vcmp.eq.s32.totalorder %v1721, 1
  %vm1850 = vcmp.eq.s32.totalorder %v1722, 1
  %vm1851 = vcmp.eq.s32.totalorder %v1723, 1
  %vm1852 = vcmp.eq.s32.totalorder %v1724, 1
  %vm1853 = vcmp.eq.s32.totalorder %v1725, 1
  %vm1854 = vcmp.eq.s32.totalorder %v1726, 1
  %vm1855 = vcmp.eq.s32.totalorder %v1727, 1
  %vm1856 = vcmp.eq.s32.totalorder %v1728, 1
  %vm1857 = vcmp.eq.s32.totalorder %v1729, 1
  %vm1858 = vcmp.eq.s32.totalorder %v1730, 1
  %vm1859 = vcmp.eq.s32.totalorder %v1731, 1
  %vm1860 = vcmp.eq.s32.totalorder %v1732, 1
  %vm1861 = vcmp.eq.s32.totalorder %v1733, 1
  %vm1862 = vcmp.eq.s32.totalorder %v1734, 1
  %vm1863 = vcmp.eq.s32.totalorder %v1735, 1
  %vm1864 = vcmp.eq.s32.totalorder %v1736, 1
  %vm1865 = vcmp.eq.s32.totalorder %v1737, 1
  %vm1866 = vcmp.eq.s32.totalorder %v1738, 1
  %vm1867 = vcmp.eq.s32.totalorder %v1739, 1
  %vm1868 = vcmp.eq.s32.totalorder %v1740, 1
  %vm1869 = vcmp.eq.s32.totalorder %v1741, 1
  %vm1870 = vcmp.eq.s32.totalorder %v1742, 1
  %vm1871 = vcmp.eq.s32.totalorder %v1743, 1
  %vm1872 = vcmp.eq.s32.totalorder %v1744, 1
  %vm1873 = vcmp.eq.s32.totalorder %v1745, 1
  %vm1874 = vcmp.eq.s32.totalorder %v1746, 1
  %vm1875 = vcmp.eq.s32.totalorder %v1747, 1
  %vm1876 = vcmp.eq.s32.totalorder %v1748, 1
  %vm1877 = vcmp.eq.s32.totalorder %v1749, 1
  %vm1878 = vcmp.eq.s32.totalorder %v1750, 1
  %vm1879 = vcmp.eq.s32.totalorder %v1751, 1
  %vm1880 = vcmp.eq.s32.totalorder %v1752, 1
  %vm1881 = vcmp.eq.s32.totalorder %v1753, 1
  %vm1882 = vcmp.eq.s32.totalorder %v1754, 1
  %vm1883 = vcmp.eq.s32.totalorder %v1755, 1
  %vm1884 = vcmp.eq.s32.totalorder %v1756, 1
  %vm1885 = vcmp.eq.s32.totalorder %v1757, 1
  %vm1886 = vcmp.eq.s32.totalorder %v1758, 1
  %vm1887 = vcmp.eq.s32.totalorder %v1759, 1
  %vm1888 = vcmp.eq.s32.totalorder %v1760, 1
  %vm1889 = vcmp.eq.s32.totalorder %v1761, 1
  %vm1890 = vcmp.eq.s32.totalorder %v1762, 1
  %vm1891 = vcmp.eq.s32.totalorder %v1763, 1
  %vm1892 = vcmp.eq.s32.totalorder %v1764, 1
  %vm1893 = vcmp.eq.s32.totalorder %v1765, 1
  %vm1894 = vcmp.eq.s32.totalorder %v1766, 1
  %vm1895 = vcmp.eq.s32.totalorder %v1767, 1
  %vm1896 = vcmp.eq.s32.totalorder %v1768, 1
  %vm1897 = vcmp.eq.s32.totalorder %v1769, 1
  %vm1898 = vcmp.eq.s32.totalorder %v1770, 1
  %vm1899 = vcmp.eq.s32.totalorder %v1771, 1
  %vm1900 = vcmp.eq.s32.totalorder %v1772, 1
  %vm1901 = vcmp.eq.s32.totalorder %v1773, 1
  %vm1902 = vcmp.eq.s32.totalorder %v1774, 1
  %vm1903 = vcmp.eq.s32.totalorder %v1775, 1
  %vm1904 = vcmp.eq.s32.totalorder %v1776, 1
  %vm1905 = vcmp.eq.s32.totalorder %v1777, 1
  %vm1906 = vcmp.eq.s32.totalorder %v1778, 1
  %vm1907 = vcmp.eq.s32.totalorder %v1779, 1
  %vm1908 = vcmp.eq.s32.totalorder %v1780, 1
  %vm1909 = vcmp.eq.s32.totalorder %v1781, 1
  %vm1910 = vcmp.eq.s32.totalorder %v1782, 1
  %vm1911 = vcmp.eq.s32.totalorder %v1783, 1
  %vm1912 = vcmp.eq.s32.totalorder %v1784, 1
  %vm1913 = vcmp.eq.s32.totalorder %v1785, 1
  %vm1914 = vcmp.eq.s32.totalorder %v1786, 1
  %vm1915 = vcmp.eq.s32.totalorder %v1787, 1
  %v1916 = vsel %vm1788, %v635, 0.0
  %v1917 = vsel %vm1789, %v638, 0.0
  %v1918 = vsel %vm1790, %v643, 0.0
  %v1919 = vsel %vm1791, %v646, 0.0
  %v1920 = vsel %vm1792, %v651, 0.0
  %v1921 = vsel %vm1793, %v654, 0.0
  %v1922 = vsel %vm1794, %v659, 0.0
  %v1923 = vsel %vm1795, %v662, 0.0
  %v1924 = vsel %vm1796, %v667, 0.0
  %v1925 = vsel %vm1797, %v670, 0.0
  %v1926 = vsel %vm1798, %v675, 0.0
  %v1927 = vsel %vm1799, %v678, 0.0
  %v1928 = vsel %vm1800, %v683, 0.0
  %v1929 = vsel %vm1801, %v686, 0.0
  %v1930 = vsel %vm1802, %v691, 0.0
  %v1931 = vsel %vm1803, %v694, 0.0
  %v1932 = vsel %vm1804, %v699, 0.0
  %v1933 = vsel %vm1805, %v702, 0.0
  %v1934 = vsel %vm1806, %v707, 0.0
  %v1935 = vsel %vm1807, %v710, 0.0
  %v1936 = vsel %vm1808, %v715, 0.0
  %v1937 = vsel %vm1809, %v718, 0.0
  %v1938 = vsel %vm1810, %v723, 0.0
  %v1939 = vsel %vm1811, %v726, 0.0
  %v1940 = vsel %vm1812, %v731, 0.0
  %v1941 = vsel %vm1813, %v734, 0.0
  %v1942 = vsel %vm1814, %v739, 0.0
  %v1943 = vsel %vm1815, %v742, 0.0
  %v1944 = vsel %vm1816, %v747, 0.0
  %v1945 = vsel %vm1817, %v750, 0.0
  %v1946 = vsel %vm1818, %v755, 0.0
  %v1947 = vsel %vm1819, %v758, 0.0
  %v1948 = vsel %vm1820, %v763, 0.0
  %v1949 = vsel %vm1821, %v766, 0.0
  %v1950 = vsel %vm1822, %v771, 0.0
  %v1951 = vsel %vm1823, %v774, 0.0
  %v1952 = vsel %vm1824, %v779, 0.0
  %v1953 = vsel %vm1825, %v782, 0.0
  %v1954 = vsel %vm1826, %v787, 0.0
  %v1955 = vsel %vm1827, %v790, 0.0
  %v1956 = vsel %vm1828, %v795, 0.0
  %v1957 = vsel %vm1829, %v798, 0.0
  %v1958 = vsel %vm1830, %v803, 0.0
  %v1959 = vsel %vm1831, %v806, 0.0
  %v1960 = vsel %vm1832, %v811, 0.0
  %v1961 = vsel %vm1833, %v814, 0.0
  %v1962 = vsel %vm1834, %v819, 0.0
  %v1963 = vsel %vm1835, %v822, 0.0
  %v1964 = vsel %vm1836, %v827, 0.0
  %v1965 = vsel %vm1837, %v830, 0.0
  %v1966 = vsel %vm1838, %v835, 0.0
  %v1967 = vsel %vm1839, %v838, 0.0
  %v1968 = vsel %vm1840, %v843, 0.0
  %v1969 = vsel %vm1841, %v846, 0.0
  %v1970 = vsel %vm1842, %v851, 0.0
  %v1971 = vsel %vm1843, %v854, 0.0
  %v1972 = vsel %vm1844, %v859, 0.0
  %v1973 = vsel %vm1845, %v862, 0.0
  %v1974 = vsel %vm1846, %v867, 0.0
  %v1975 = vsel %vm1847, %v870, 0.0
  %v1976 = vsel %vm1848, %v875, 0.0
  %v1977 = vsel %vm1849, %v878, 0.0
  %v1978 = vsel %vm1850, %v883, 0.0
  %v1979 = vsel %vm1851, %v886, 0.0
  %v1980 = vsel %vm1852, %v891, 0.0
  %v1981 = vsel %vm1853, %v894, 0.0
  %v1982 = vsel %vm1854, %v899, 0.0
  %v1983 = vsel %vm1855, %v902, 0.0
  %v1984 = vsel %vm1856, %v907, 0.0
  %v1985 = vsel %vm1857, %v910, 0.0
  %v1986 = vsel %vm1858, %v915, 0.0
  %v1987 = vsel %vm1859, %v918, 0.0
  %v1988 = vsel %vm1860, %v923, 0.0
  %v1989 = vsel %vm1861, %v926, 0.0
  %v1990 = vsel %vm1862, %v931, 0.0
  %v1991 = vsel %vm1863, %v934, 0.0
  %v1992 = vsel %vm1864, %v939, 0.0
  %v1993 = vsel %vm1865, %v942, 0.0
  %v1994 = vsel %vm1866, %v947, 0.0
  %v1995 = vsel %vm1867, %v950, 0.0
  %v1996 = vsel %vm1868, %v955, 0.0
  %v1997 = vsel %vm1869, %v958, 0.0
  %v1998 = vsel %vm1870, %v963, 0.0
  %v1999 = vsel %vm1871, %v966, 0.0
  %v2000 = vsel %vm1872, %v971, 0.0
  %v2001 = vsel %vm1873, %v974, 0.0
  %v2002 = vsel %vm1874, %v979, 0.0
  %v2003 = vsel %vm1875, %v982, 0.0
  %v2004 = vsel %vm1876, %v987, 0.0
  %v2005 = vsel %vm1877, %v990, 0.0
  %v2006 = vsel %vm1878, %v995, 0.0
  %v2007 = vsel %vm1879, %v998, 0.0
  %v2008 = vsel %vm1880, %v1003, 0.0
  %v2009 = vsel %vm1881, %v1006, 0.0
  %v2010 = vsel %vm1882, %v1011, 0.0
  %v2011 = vsel %vm1883, %v1014, 0.0
  %v2012 = vsel %vm1884, %v1019, 0.0
  %v2013 = vsel %vm1885, %v1022, 0.0
  %v2014 = vsel %vm1886, %v1027, 0.0
  %v2015 = vsel %vm1887, %v1030, 0.0
  %v2016 = vsel %vm1888, %v1035, 0.0
  %v2017 = vsel %vm1889, %v1038, 0.0
  %v2018 = vsel %vm1890, %v1043, 0.0
  %v2019 = vsel %vm1891, %v1046, 0.0
  %v2020 = vsel %vm1892, %v1051, 0.0
  %v2021 = vsel %vm1893, %v1054, 0.0
  %v2022 = vsel %vm1894, %v1059, 0.0
  %v2023 = vsel %vm1895, %v1062, 0.0
  %v2024 = vsel %vm1896, %v1067, 0.0
  %v2025 = vsel %vm1897, %v1070, 0.0
  %v2026 = vsel %vm1898, %v1075, 0.0
  %v2027 = vsel %vm1899, %v1078, 0.0
  %v2028 = vsel %vm1900, %v1083, 0.0
  %v2029 = vsel %vm1901, %v1086, 0.0
  %v2030 = vsel %vm1902, %v1091, 0.0
  %v2031 = vsel %vm1903, %v1094, 0.0
  %v2032 = vsel %vm1904, %v1099, 0.0
  %v2033 = vsel %vm1905, %v1102, 0.0
  %v2034 = vsel %vm1906, %v1107, 0.0
  %v2035 = vsel %vm1907, %v1110, 0.0
  %v2036 = vsel %vm1908, %v1115, 0.0
  %v2037 = vsel %vm1909, %v1118, 0.0
  %v2038 = vsel %vm1910, %v1123, 0.0
  %v2039 = vsel %vm1911, %v1126, 0.0
  %v2040 = vsel %vm1912, %v1131, 0.0
  %v2041 = vsel %vm1913, %v1134, 0.0
  %v2042 = vsel %vm1914, %v1139, 0.0
  %v2043 = vsel %vm1915, %v1142, 0.0
  %v2044 = vadd.f32 %v1916, %v1917
  %v2045 = vadd.f32 %v2044, %v1918
  %v2046 = vadd.f32 %v2045, %v1919
  %v2047 = vadd.f32 %v2046, %v1920
  %v2048 = vadd.f32 %v2047, %v1921
  %v2049 = vadd.f32 %v2048, %v1922
  %v2050 = vadd.f32 %v2049, %v1923
  %v2051 = vadd.f32 %v2050, %v1924
  %v2052 = vadd.f32 %v2051, %v1925
  %v2053 = vadd.f32 %v2052, %v1926
  %v2054 = vadd.f32 %v2053, %v1927
  %v2055 = vadd.f32 %v2054, %v1928
  %v2056 = vadd.f32 %v2055, %v1929
  %v2057 = vadd.f32 %v2056, %v1930
  %v2058 = vadd.f32 %v2057, %v1931
  %v2059 = vadd.f32 %v2058, %v1932
  %v2060 = vadd.f32 %v2059, %v1933
  %v2061 = vadd.f32 %v2060, %v1934
  %v2062 = vadd.f32 %v2061, %v1935
  %v2063 = vadd.f32 %v2062, %v1936
  %v2064 = vadd.f32 %v2063, %v1937
  %v2065 = vadd.f32 %v2064, %v1938
  %v2066 = vadd.f32 %v2065, %v1939
  %v2067 = vadd.f32 %v2066, %v1940
  %v2068 = vadd.f32 %v2067, %v1941
  %v2069 = vadd.f32 %v2068, %v1942
  %v2070 = vadd.f32 %v2069, %v1943
  %v2071 = vadd.f32 %v2070, %v1944
  %v2072 = vadd.f32 %v2071, %v1945
  %v2073 = vadd.f32 %v2072, %v1946
  %v2074 = vadd.f32 %v2073, %v1947
  %v2075 = vadd.f32 %v2074, %v1948
  %v2076 = vadd.f32 %v2075, %v1949
  %v2077 = vadd.f32 %v2076, %v1950
  %v2078 = vadd.f32 %v2077, %v1951
  %v2079 = vadd.f32 %v2078, %v1952
  %v2080 = vadd.f32 %v2079, %v1953
  %v2081 = vadd.f32 %v2080, %v1954
  %v2082 = vadd.f32 %v2081, %v1955
  %v2083 = vadd.f32 %v2082, %v1956
  %v2084 = vadd.f32 %v2083, %v1957
  %v2085 = vadd.f32 %v2084, %v1958
  %v2086 = vadd.f32 %v2085, %v1959
  %v2087 = vadd.f32 %v2086, %v1960
  %v2088 = vadd.f32 %v2087, %v1961
  %v2089 = vadd.f32 %v2088, %v1962
  %v2090 = vadd.f32 %v2089, %v1963
  %v2091 = vadd.f32 %v2090, %v1964
  %v2092 = vadd.f32 %v2091, %v1965
  %v2093 = vadd.f32 %v2092, %v1966
  %v2094 = vadd.f32 %v2093, %v1967
  %v2095 = vadd.f32 %v2094, %v1968
  %v2096 = vadd.f32 %v2095, %v1969
  %v2097 = vadd.f32 %v2096, %v1970
  %v2098 = vadd.f32 %v2097, %v1971
  %v2099 = vadd.f32 %v2098, %v1972
  %v2100 = vadd.f32 %v2099, %v1973
  %v2101 = vadd.f32 %v2100, %v1974
  %v2102 = vadd.f32 %v2101, %v1975
  %v2103 = vadd.f32 %v2102, %v1976
  %v2104 = vadd.f32 %v2103, %v1977
  %v2105 = vadd.f32 %v2104, %v1978
  %v2106 = vadd.f32 %v2105, %v1979
  %v2107 = vadd.f32 %v2106, %v1980
  %v2108 = vadd.f32 %v2107, %v1981
  %v2109 = vadd.f32 %v2108, %v1982
  %v2110 = vadd.f32 %v2109, %v1983
  %v2111 = vadd.f32 %v2110, %v1984
  %v2112 = vadd.f32 %v2111, %v1985
  %v2113 = vadd.f32 %v2112, %v1986
  %v2114 = vadd.f32 %v2113, %v1987
  %v2115 = vadd.f32 %v2114, %v1988
  %v2116 = vadd.f32 %v2115, %v1989
  %v2117 = vadd.f32 %v2116, %v1990
  %v2118 = vadd.f32 %v2117, %v1991
  %v2119 = vadd.f32 %v2118, %v1992
  %v2120 = vadd.f32 %v2119, %v1993
  %v2121 = vadd.f32 %v2120, %v1994
  %v2122 = vadd.f32 %v2121, %v1995
  %v2123 = vadd.f32 %v2122, %v1996
  %v2124 = vadd.f32 %v2123, %v1997
  %v2125 = vadd.f32 %v2124, %v1998
  %v2126 = vadd.f32 %v2125, %v1999
  %v2127 = vadd.f32 %v2126, %v2000
  %v2128 = vadd.f32 %v2127, %v2001
  %v2129 = vadd.f32 %v2128, %v2002
  %v2130 = vadd.f32 %v2129, %v2003
  %v2131 = vadd.f32 %v2130, %v2004
  %v2132 = vadd.f32 %v2131, %v2005
  %v2133 = vadd.f32 %v2132, %v2006
  %v2134 = vadd.f32 %v2133, %v2007
  %v2135 = vadd.f32 %v2134, %v2008
  %v2136 = vadd.f32 %v2135, %v2009
  %v2137 = vadd.f32 %v2136, %v2010
  %v2138 = vadd.f32 %v2137, %v2011
  %v2139 = vadd.f32 %v2138, %v2012
  %v2140 = vadd.f32 %v2139, %v2013
  %v2141 = vadd.f32 %v2140, %v2014
  %v2142 = vadd.f32 %v2141, %v2015
  %v2143 = vadd.f32 %v2142, %v2016
  %v2144 = vadd.f32 %v2143, %v2017
  %v2145 = vadd.f32 %v2144, %v2018
  %v2146 = vadd.f32 %v2145, %v2019
  %v2147 = vadd.f32 %v2146, %v2020
  %v2148 = vadd.f32 %v2147, %v2021
  %v2149 = vadd.f32 %v2148, %v2022
  %v2150 = vadd.f32 %v2149, %v2023
  %v2151 = vadd.f32 %v2150, %v2024
  %v2152 = vadd.f32 %v2151, %v2025
  %v2153 = vadd.f32 %v2152, %v2026
  %v2154 = vadd.f32 %v2153, %v2027
  %v2155 = vadd.f32 %v2154, %v2028
  %v2156 = vadd.f32 %v2155, %v2029
  %v2157 = vadd.f32 %v2156, %v2030
  %v2158 = vadd.f32 %v2157, %v2031
  %v2159 = vadd.f32 %v2158, %v2032
  %v2160 = vadd.f32 %v2159, %v2033
  %v2161 = vadd.f32 %v2160, %v2034
  %v2162 = vadd.f32 %v2161, %v2035
  %v2163 = vadd.f32 %v2162, %v2036
  %v2164 = vadd.f32 %v2163, %v2037
  %v2165 = vadd.f32 %v2164, %v2038
  %v2166 = vadd.f32 %v2165, %v2039
  %v2167 = vadd.f32 %v2166, %v2040
  %v2168 = vadd.f32 %v2167, %v2041
  %v2169 = vadd.f32 %v2168, %v2042
  %v2170 = vadd.f32 %v2169, %v2043
  %v2171 = vrot.slane %v2170, 4
  %v2172 = vadd.f32 %v2170, %v2171
  %v2173 = vrot.slane %v2172, 2
  %v2174 = vadd.f32 %v2172, %v2173
  %v2175 = vrot.slane %v2174, 1
  %v2176 = vadd.f32 %v2174, %v2175
  %v2177 = vmul.f32 %v1916, %v1916
  %v2178 = vmul.f32 %v1917, %v1917
  %v2179 = vmul.f32 %v1918, %v1918
  %v2180 = vmul.f32 %v1919, %v1919
  %v2181 = vmul.f32 %v1920, %v1920
  %v2182 = vmul.f32 %v1921, %v1921
  %v2183 = vmul.f32 %v1922, %v1922
  %v2184 = vmul.f32 %v1923, %v1923
  %v2185 = vmul.f32 %v1924, %v1924
  %v2186 = vmul.f32 %v1925, %v1925
  %v2187 = vmul.f32 %v1926, %v1926
  %v2188 = vmul.f32 %v1927, %v1927
  %v2189 = vmul.f32 %v1928, %v1928
  %v2190 = vmul.f32 %v1929, %v1929
  %v2191 = vmul.f32 %v1930, %v1930
  %v2192 = vmul.f32 %v1931, %v1931
  %v2193 = vmul.f32 %v1932, %v1932
  %v2194 = vmul.f32 %v1933, %v1933
  %v2195 = vmul.f32 %v1934, %v1934
  %v2196 = vmul.f32 %v1935, %v1935
  %v2197 = vmul.f32 %v1936, %v1936
  %v2198 = vmul.f32 %v1937, %v1937
  %v2199 = vmul.f32 %v1938, %v1938
  %v2200 = vmul.f32 %v1939, %v1939
  %v2201 = vmul.f32 %v1940, %v1940
  %v2202 = vmul.f32 %v1941, %v1941
  %v2203 = vmul.f32 %v1942, %v1942
  %v2204 = vmul.f32 %v1943, %v1943
  %v2205 = vmul.f32 %v1944, %v1944
  %v2206 = vmul.f32 %v1945, %v1945
  %v2207 = vmul.f32 %v1946, %v1946
  %v2208 = vmul.f32 %v1947, %v1947
  %v2209 = vmul.f32 %v1948, %v1948
  %v2210 = vmul.f32 %v1949, %v1949
  %v2211 = vmul.f32 %v1950, %v1950
  %v2212 = vmul.f32 %v1951, %v1951
  %v2213 = vmul.f32 %v1952, %v1952
  %v2214 = vmul.f32 %v1953, %v1953
  %v2215 = vmul.f32 %v1954, %v1954
  %v2216 = vmul.f32 %v1955, %v1955
  %v2217 = vmul.f32 %v1956, %v1956
  %v2218 = vmul.f32 %v1957, %v1957
  %v2219 = vmul.f32 %v1958, %v1958
  %v2220 = vmul.f32 %v1959, %v1959
  %v2221 = vmul.f32 %v1960, %v1960
  %v2222 = vmul.f32 %v1961, %v1961
  %v2223 = vmul.f32 %v1962, %v1962
  %v2224 = vmul.f32 %v1963, %v1963
  %v2225 = vmul.f32 %v1964, %v1964
  %v2226 = vmul.f32 %v1965, %v1965
  %v2227 = vmul.f32 %v1966, %v1966
  %v2228 = vmul.f32 %v1967, %v1967
  %v2229 = vmul.f32 %v1968, %v1968
  %v2230 = vmul.f32 %v1969, %v1969
  %v2231 = vmul.f32 %v1970, %v1970
  %v2232 = vmul.f32 %v1971, %v1971
  %v2233 = vmul.f32 %v1972, %v1972
  %v2234 = vmul.f32 %v1973, %v1973
  %v2235 = vmul.f32 %v1974, %v1974
  %v2236 = vmul.f32 %v1975, %v1975
  %v2237 = vmul.f32 %v1976, %v1976
  %v2238 = vmul.f32 %v1977, %v1977
  %v2239 = vmul.f32 %v1978, %v1978
  %v2240 = vmul.f32 %v1979, %v1979
  %v2241 = vmul.f32 %v1980, %v1980
  %v2242 = vmul.f32 %v1981, %v1981
  %v2243 = vmul.f32 %v1982, %v1982
  %v2244 = vmul.f32 %v1983, %v1983
  %v2245 = vmul.f32 %v1984, %v1984
  %v2246 = vmul.f32 %v1985, %v1985
  %v2247 = vmul.f32 %v1986, %v1986
  %v2248 = vmul.f32 %v1987, %v1987
  %v2249 = vmul.f32 %v1988, %v1988
  %v2250 = vmul.f32 %v1989, %v1989
  %v2251 = vmul.f32 %v1990, %v1990
  %v2252 = vmul.f32 %v1991, %v1991
  %v2253 = vmul.f32 %v1992, %v1992
  %v2254 = vmul.f32 %v1993, %v1993
  %v2255 = vmul.f32 %v1994, %v1994
  %v2256 = vmul.f32 %v1995, %v1995
  %v2257 = vmul.f32 %v1996, %v1996
  %v2258 = vmul.f32 %v1997, %v1997
  %v2259 = vmul.f32 %v1998, %v1998
  %v2260 = vmul.f32 %v1999, %v1999
  %v2261 = vmul.f32 %v2000, %v2000
  %v2262 = vmul.f32 %v2001, %v2001
  %v2263 = vmul.f32 %v2002, %v2002
  %v2264 = vmul.f32 %v2003, %v2003
  %v2265 = vmul.f32 %v2004, %v2004
  %v2266 = vmul.f32 %v2005, %v2005
  %v2267 = vmul.f32 %v2006, %v2006
  %v2268 = vmul.f32 %v2007, %v2007
  %v2269 = vmul.f32 %v2008, %v2008
  %v2270 = vmul.f32 %v2009, %v2009
  %v2271 = vmul.f32 %v2010, %v2010
  %v2272 = vmul.f32 %v2011, %v2011
  %v2273 = vmul.f32 %v2012, %v2012
  %v2274 = vmul.f32 %v2013, %v2013
  %v2275 = vmul.f32 %v2014, %v2014
  %v2276 = vmul.f32 %v2015, %v2015
  %v2277 = vmul.f32 %v2016, %v2016
  %v2278 = vmul.f32 %v2017, %v2017
  %v2279 = vmul.f32 %v2018, %v2018
  %v2280 = vmul.f32 %v2019, %v2019
  %v2281 = vmul.f32 %v2020, %v2020
  %v2282 = vmul.f32 %v2021, %v2021
  %v2283 = vmul.f32 %v2022, %v2022
  %v2284 = vmul.f32 %v2023, %v2023
  %v2285 = vmul.f32 %v2024, %v2024
  %v2286 = vmul.f32 %v2025, %v2025
  %v2287 = vmul.f32 %v2026, %v2026
  %v2288 = vmul.f32 %v2027, %v2027
  %v2289 = vmul.f32 %v2028, %v2028
  %v2290 = vmul.f32 %v2029, %v2029
  %v2291 = vmul.f32 %v2030, %v2030
  %v2292 = vmul.f32 %v2031, %v2031
  %v2293 = vmul.f32 %v2032, %v2032
  %v2294 = vmul.f32 %v2033, %v2033
  %v2295 = vmul.f32 %v2034, %v2034
  %v2296 = vmul.f32 %v2035, %v2035
  %v2297 = vmul.f32 %v2036, %v2036
  %v2298 = vmul.f32 %v2037, %v2037
  %v2299 = vmul.f32 %v2038, %v2038
  %v2300 = vmul.f32 %v2039, %v2039
  %v2301 = vmul.f32 %v2040, %v2040
  %v2302 = vmul.f32 %v2041, %v2041
  %v2303 = vmul.f32 %v2042, %v2042
  %v2304 = vmul.f32 %v2043, %v2043
  %v2305 = vadd.f32 %v2177, %v2178
  %v2306 = vadd.f32 %v2305, %v2179
  %v2307 = vadd.f32 %v2306, %v2180
  %v2308 = vadd.f32 %v2307, %v2181
  %v2309 = vadd.f32 %v2308, %v2182
  %v2310 = vadd.f32 %v2309, %v2183
  %v2311 = vadd.f32 %v2310, %v2184
  %v2312 = vadd.f32 %v2311, %v2185
  %v2313 = vadd.f32 %v2312, %v2186
  %v2314 = vadd.f32 %v2313, %v2187
  %v2315 = vadd.f32 %v2314, %v2188
  %v2316 = vadd.f32 %v2315, %v2189
  %v2317 = vadd.f32 %v2316, %v2190
  %v2318 = vadd.f32 %v2317, %v2191
  %v2319 = vadd.f32 %v2318, %v2192
  %v2320 = vadd.f32 %v2319, %v2193
  %v2321 = vadd.f32 %v2320, %v2194
  %v2322 = vadd.f32 %v2321, %v2195
  %v2323 = vadd.f32 %v2322, %v2196
  %v2324 = vadd.f32 %v2323, %v2197
  %v2325 = vadd.f32 %v2324, %v2198
  %v2326 = vadd.f32 %v2325, %v2199
  %v2327 = vadd.f32 %v2326, %v2200
  %v2328 = vadd.f32 %v2327, %v2201
  %v2329 = vadd.f32 %v2328, %v2202
  %v2330 = vadd.f32 %v2329, %v2203
  %v2331 = vadd.f32 %v2330, %v2204
  %v2332 = vadd.f32 %v2331, %v2205
  %v2333 = vadd.f32 %v2332, %v2206
  %v2334 = vadd.f32 %v2333, %v2207
  %v2335 = vadd.f32 %v2334, %v2208
  %v2336 = vadd.f32 %v2335, %v2209
  %v2337 = vadd.f32 %v2336, %v2210
  %v2338 = vadd.f32 %v2337, %v2211
  %v2339 = vadd.f32 %v2338, %v2212
  %v2340 = vadd.f32 %v2339, %v2213
  %v2341 = vadd.f32 %v2340, %v2214
  %v2342 = vadd.f32 %v2341, %v2215
  %v2343 = vadd.f32 %v2342, %v2216
  %v2344 = vadd.f32 %v2343, %v2217
  %v2345 = vadd.f32 %v2344, %v2218
  %v2346 = vadd.f32 %v2345, %v2219
  %v2347 = vadd.f32 %v2346, %v2220
  %v2348 = vadd.f32 %v2347, %v2221
  %v2349 = vadd.f32 %v2348, %v2222
  %v2350 = vadd.f32 %v2349, %v2223
  %v2351 = vadd.f32 %v2350, %v2224
  %v2352 = vadd.f32 %v2351, %v2225
  %v2353 = vadd.f32 %v2352, %v2226
  %v2354 = vadd.f32 %v2353, %v2227
  %v2355 = vadd.f32 %v2354, %v2228
  %v2356 = vadd.f32 %v2355, %v2229
  %v2357 = vadd.f32 %v2356, %v2230
  %v2358 = vadd.f32 %v2357, %v2231
  %v2359 = vadd.f32 %v2358, %v2232
  %v2360 = vadd.f32 %v2359, %v2233
  %v2361 = vadd.f32 %v2360, %v2234
  %v2362 = vadd.f32 %v2361, %v2235
  %v2363 = vadd.f32 %v2362, %v2236
  %v2364 = vadd.f32 %v2363, %v2237
  %v2365 = vadd.f32 %v2364, %v2238
  %v2366 = vadd.f32 %v2365, %v2239
  %v2367 = vadd.f32 %v2366, %v2240
  %v2368 = vadd.f32 %v2367, %v2241
  %v2369 = vadd.f32 %v2368, %v2242
  %v2370 = vadd.f32 %v2369, %v2243
  %v2371 = vadd.f32 %v2370, %v2244
  %v2372 = vadd.f32 %v2371, %v2245
  %v2373 = vadd.f32 %v2372, %v2246
  %v2374 = vadd.f32 %v2373, %v2247
  %v2375 = vadd.f32 %v2374, %v2248
  %v2376 = vadd.f32 %v2375, %v2249
  %v2377 = vadd.f32 %v2376, %v2250
  %v2378 = vadd.f32 %v2377, %v2251
  %v2379 = vadd.f32 %v2378, %v2252
  %v2380 = vadd.f32 %v2379, %v2253
  %v2381 = vadd.f32 %v2380, %v2254
  %v2382 = vadd.f32 %v2381, %v2255
  %v2383 = vadd.f32 %v2382, %v2256
  %v2384 = vadd.f32 %v2383, %v2257
  %v2385 = vadd.f32 %v2384, %v2258
  %v2386 = vadd.f32 %v2385, %v2259
  %v2387 = vadd.f32 %v2386, %v2260
  %v2388 = vadd.f32 %v2387, %v2261
  %v2389 = vadd.f32 %v2388, %v2262
  %v2390 = vadd.f32 %v2389, %v2263
  %v2391 = vadd.f32 %v2390, %v2264
  %v2392 = vadd.f32 %v2391, %v2265
  %v2393 = vadd.f32 %v2392, %v2266
  %v2394 = vadd.f32 %v2393, %v2267
  %v2395 = vadd.f32 %v2394, %v2268
  %v2396 = vadd.f32 %v2395, %v2269
  %v2397 = vadd.f32 %v2396, %v2270
  %v2398 = vadd.f32 %v2397, %v2271
  %v2399 = vadd.f32 %v2398, %v2272
  %v2400 = vadd.f32 %v2399, %v2273
  %v2401 = vadd.f32 %v2400, %v2274
  %v2402 = vadd.f32 %v2401, %v2275
  %v2403 = vadd.f32 %v2402, %v2276
  %v2404 = vadd.f32 %v2403, %v2277
  %v2405 = vadd.f32 %v2404, %v2278
  %v2406 = vadd.f32 %v2405, %v2279
  %v2407 = vadd.f32 %v2406, %v2280
  %v2408 = vadd.f32 %v2407, %v2281
  %v2409 = vadd.f32 %v2408, %v2282
  %v2410 = vadd.f32 %v2409, %v2283
  %v2411 = vadd.f32 %v2410, %v2284
  %v2412 = vadd.f32 %v2411, %v2285
  %v2413 = vadd.f32 %v2412, %v2286
  %v2414 = vadd.f32 %v2413, %v2287
  %v2415 = vadd.f32 %v2414, %v2288
  %v2416 = vadd.f32 %v2415, %v2289
  %v2417 = vadd.f32 %v2416, %v2290
  %v2418 = vadd.f32 %v2417, %v2291
  %v2419 = vadd.f32 %v2418, %v2292
  %v2420 = vadd.f32 %v2419, %v2293
  %v2421 = vadd.f32 %v2420, %v2294
  %v2422 = vadd.f32 %v2421, %v2295
  %v2423 = vadd.f32 %v2422, %v2296
  %v2424 = vadd.f32 %v2423, %v2297
  %v2425 = vadd.f32 %v2424, %v2298
  %v2426 = vadd.f32 %v2425, %v2299
  %v2427 = vadd.f32 %v2426, %v2300
  %v2428 = vadd.f32 %v2427, %v2301
  %v2429 = vadd.f32 %v2428, %v2302
  %v2430 = vadd.f32 %v2429, %v2303
  %v2431 = vadd.f32 %v2430, %v2304
  %v2432 = vrot.slane %v2431, 4
  %v2433 = vadd.f32 %v2431, %v2432
  %v2434 = vrot.slane %v2433, 2
  %v2435 = vadd.f32 %v2433, %v2434
  %v2436 = vrot.slane %v2435, 1
  %v2437 = vadd.f32 %v2435, %v2436
  %vm2438 = vcmask 1040384
  %v2439 = vsel %vm2438, %v2176, %v2437
  %2440 = vst [vmem:[%s4] sm:$0x3] %v2439
  // Predicated region
  $region14: #{conv3d_custom_forward.2} parent=0 // pred_check
    _
  $region15: #{conv3d_custom_forward.2} parent=0 // pred_check_branch
    %2442 = sbr.rel (0) target = $region17
  $region16: #{conv3d_custom_forward.2} parent=0 // pred_region
    _
  $region17: #{conv3d_custom_forward.2} parent=0 // pred_fallthru
    _
  // Predicated region
  $region18: #{conv3d_custom_forward.2} parent=0 // pred_check
    _
  $region19: #{conv3d_custom_forward.2} parent=0 // pred_check_branch
    %2444 = sbr.rel (0) target = $region21
  $region20: #{conv3d_custom_forward.2} parent=0 // pred_region
    _
  $region21: #{conv3d_custom_forward.2} parent=0 // pred_fallthru
    _
  // Predicated region
  $region22: #{conv3d_custom_forward.2} parent=0 // pred_check
    _
  $region23: #{conv3d_custom_forward.2} parent=0 // pred_check_branch
    %2446 = sbr.rel (0) target = $region25
  $region24: #{conv3d_custom_forward.2} parent=0 // pred_region
    _
  $region25: #{conv3d_custom_forward.2} parent=0 // pred_fallthru
    _
  // Predicated region
  $region26: #{conv3d_custom_forward.2} parent=0 // pred_check
    _
  $region27: #{conv3d_custom_forward.2} parent=0 // pred_check_branch
    %2448 = sbr.rel (0) target = $region29
  $region28: #{conv3d_custom_forward.2} parent=0 // pred_region
    _
  $region29: #{conv3d_custom_forward.2} parent=0 // pred_fallthru
    _

</llo_original>
